<compile_context>
chip_gen: v5e
topology: v5e:2x2
jax: 0.10.0
libtpu: 0.0.40
codegen_flags: <defaults>
</compile_context>

<pallas_src>
import math

import jax
import jax.numpy as jnp
from jax.experimental import pallas as pl
from jax.experimental.pallas import tpu as pltpu


def down_kernel(x_ref, w1_ref, b1_ref, w2_ref, b2_ref, o_ref):
    # x_ref block: (1, Hp+4, 2, Wp+4, 2*Cin) -- one batch image, pooled coords zero-padded by 2 in H/W.
    _, hpad, _, wpad, two_c = x_ref.shape
    cin = two_c // 2
    hp = hpad - 4                       # pooled image height
    wp = wpad - 4                       # pooled image width
    cm = w1_ref.shape[1]
    th = o_ref.shape[1] // wp           # pooled rows produced by this grid step
    r1 = th + 2                         # conv1 rows kept: tile + 1-row halo on each side
    w1cols = wp + 2                     # conv1 cols kept: full width + 1-col halo on each side

    t = pl.program_id(1)
    row0 = pl.multiple_of(t * th, th)   # window start in padded pooled-row coordinates

    # ---- MaxPool2d(2) on the (TH+4)-row halo window ------------------------------------------
    v = x_ref[0, pl.ds(row0, th + 4)]                       # (TH+4, 2, Wp+4, 2*Cin)
    hmax = jnp.maximum(v[:, 0], v[:, 1])                    # pool over the H pair
    ap = jnp.maximum(hmax[..., :cin], hmax[..., cin:])      # pool over the W pair -> (TH+4, Wp+4, Cin)

    # ---- Conv1 (3x3, SAME) as a single im2col matmul (BN1 scale already folded into w1) ------
    taps1 = jnp.concatenate(
        [ap[dy:dy + r1, dx:dx + w1cols, :] for dy in range(3) for dx in range(3)],
        axis=-1)                                            # (R1, Wp+2, 9*Cin)
    taps1 = taps1.reshape(r1 * w1cols, 9 * cin).astype(jnp.bfloat16)
    h1 = jnp.dot(taps1, w1_ref[...], preferred_element_type=jnp.float32)
    h1 = jnp.maximum(h1 + b1_ref[...], 0.0)                 # BN1 bias + ReLU (Dropout = identity)
    h1 = h1.reshape(r1, w1cols, cm)

    # h1 rows/cols that fall outside the real image act as conv2's zero padding -> zero them.
    ri = jax.lax.broadcasted_iota(jnp.int32, (r1, 1, 1), 0)
    ci = jax.lax.broadcasted_iota(jnp.int32, (1, w1cols, 1), 1)
    g_row = t * th - 1 + ri
    valid = (g_row >= 0) & (g_row < hp) & (ci >= 1) & (ci <= wp)
    h1 = jnp.where(valid, h1, 0.0)

    # ---- Conv2 (3x3, SAME) as a single im2col matmul (BN2 scale already folded into w2) ------
    taps2 = jnp.concatenate(
        [h1[dy:dy + th, dx:dx + wp, :] for dy in range(3) for dx in range(3)],
        axis=-1)                                            # (TH, Wp, 9*Cm)
    taps2 = taps2.reshape(th * wp, 9 * cm).astype(jnp.bfloat16)
    h2 = jnp.dot(taps2, w2_ref[...], preferred_element_type=jnp.float32)
    h2 = jnp.maximum(h2 + b2_ref[...], 0.0)                 # BN2 bias + ReLU (Dropout = identity)

    o_ref[0] = h2.astype(o_ref.dtype)                       # lane-dense (TH*Wp, Cout_pad) store


def _pick_tile_rows(hp, target=64):
    """Largest divisor of hp that is <= target (bounds per-tile VMEM on big images)."""
    if hp <= target:
        return hp
    for cand in range(target, 0, -1):
        if hp % cand == 0:
            return cand
    return hp


def down_forward(x_nchw, w1, scale1, bias1, w2, scale2, bias2, *, tile_rows=None):
    """x_nchw: (N, Cin, H, W) f32; w1/w2 in HWIO; scale/bias = folded eval-mode BatchNorm."""
    N, Cin, H, W = x_nchw.shape
    assert H % 2 == 0 and W % 2 == 0
    Hp, Wp = H // 2, W // 2
    Cm = w1.shape[-1]
    Cout = w2.shape[-1]
    LANES = 128
    Cout_pad = ((Cout + LANES - 1) // LANES) * LANES

    TH = _pick_tile_rows(Hp) if tile_rows is None else tile_rows
    assert Hp % TH == 0
    n_tiles = Hp // TH

    # NCHW -> NHWC -> (N, Hp, 2, Wp, 2*Cin) (pool-layout split done once here, not in-kernel),
    # then zero-pad pooled H and pooled W by 2 on each side (serves as conv SAME padding + halo).
    x_nhwc = jnp.transpose(x_nchw, (0, 2, 3, 1)).astype(jnp.float32)
    x_r = x_nhwc.reshape(N, Hp, 2, Wp, 2 * Cin)
    x_pad = jnp.pad(x_r, ((0, 0), (2, 2), (0, 0), (2, 2), (0, 0)))

    # Fold BN scale into the conv weights; pad conv2's output channels to a lane multiple; bf16 for MXU.
    w1f = (w1 * scale1.reshape(1, 1, 1, Cm)).reshape(9 * Cin, Cm).astype(jnp.bfloat16)
    w2s = w2.astype(jnp.float32) * scale2.reshape(1, 1, 1, Cout)
    w2f = jnp.zeros((3, 3, Cm, Cout_pad), jnp.float32).at[..., :Cout].set(w2s)
    w2f = w2f.reshape(9 * Cm, Cout_pad).astype(jnp.bfloat16)
    b1r = bias1.reshape(1, Cm).astype(jnp.float32)
    b2r = jnp.zeros((1, Cout_pad), jnp.float32).at[0, :Cout].set(bias2.astype(jnp.float32))

    # Per-grid-step VMEM budget -> explicit vmem_limit_bytes.
    # (On v7x: 64 MiB physical / 32 MiB default scoped -- pick tile_rows so `est` stays <~48 MiB.)
    bytes_in = (Hp + 4) * 2 * (Wp + 4) * 2 * Cin * 4
    bytes_out = TH * Wp * Cout_pad * 4
    bytes_w = (9 * Cin * Cm + 9 * Cm * Cout_pad) * 2 + (Cm + Cout_pad) * 4
    bytes_taps = ((TH + 2) * (Wp + 4) * 9 * Cin + TH * Wp * 9 * Cm) * 4
    est = 2 * bytes_in + 2 * bytes_out + 2 * bytes_w + 4 * bytes_taps
    vmem_limit = int(min(max(est, 32 * 1024 * 1024), 96 * 1024 * 1024))

    out_flat = pl.pallas_call(
        down_kernel,
        out_shape=jax.ShapeDtypeStruct((N, Hp * Wp, Cout_pad), jnp.float32),
        grid_spec=pltpu.PrefetchScalarGridSpec(
            num_scalar_prefetch=0,
            grid=(N, n_tiles),
            in_specs=[
                pl.BlockSpec((1, Hp + 4, 2, Wp + 4, 2 * Cin), lambda b, t: (b, 0, 0, 0, 0)),
                pl.BlockSpec((9 * Cin, Cm), lambda b, t: (0, 0)),
                pl.BlockSpec((1, Cm), lambda b, t: (0, 0)),
                pl.BlockSpec((9 * Cm, Cout_pad), lambda b, t: (0, 0)),
                pl.BlockSpec((1, Cout_pad), lambda b, t: (0, 0)),
            ],
            out_specs=pl.BlockSpec((1, TH * Wp, Cout_pad), lambda b, t: (b, t, 0)),
        ),
        compiler_params=pltpu.CompilerParams(
            dimension_semantics=("parallel", "parallel"),
            vmem_limit_bytes=vmem_limit),
    )(x_pad, w1f, b1r, w2f, b2r)

    out_nhwc = out_flat[..., :Cout].reshape(N, Hp, Wp, Cout)
    return jnp.transpose(out_nhwc, (0, 3, 1, 2))              # back to NCHW


def ref_forward(x_nchw, w1, scale1, bias1, w2, scale2, bias2):
    """Pure-JAX f32 reference (same inference-mode semantics)."""
    x = jnp.transpose(x_nchw, (0, 2, 3, 1))                   # NHWC
    N, H, W, C = x.shape
    xp = jnp.max(x.reshape(N, H // 2, 2, W // 2, 2, C), axis=(2, 4))

    def conv(a, w):
        return jax.lax.conv_general_dilated(
            a, w, window_strides=(1, 1), padding="SAME",
            dimension_numbers=("NHWC", "HWIO", "NHWC"),
            precision=jax.lax.Precision.HIGHEST)

    h = jnp.maximum(conv(xp, w1) * scale1.reshape(1, 1, 1, -1)
                    + bias1.reshape(1, 1, 1, -1), 0.0)
    h = jnp.maximum(conv(h, w2) * scale2.reshape(1, 1, 1, -1)
                    + bias2.reshape(1, 1, 1, -1), 0.0)
    return jnp.transpose(h, (0, 3, 1, 2))


if __name__ == "__main__":
    key = jax.random.PRNGKey(0)
    ks = jax.random.split(key, 12)

    N, Cin, Cout, H, W = 2, 4, 8, 16, 16
    Cm = Cout                                                # DoubleConv: mid = out
    eps = 1e-5

    x = jax.random.normal(ks[0], (N, Cin, H, W), dtype=jnp.float32)

    # Conv weights (HWIO), kaiming-ish scale
    w1 = jax.random.normal(ks[1], (3, 3, Cin, Cm), jnp.float32) / math.sqrt(9 * Cin)
    w2 = jax.random.normal(ks[2], (3, 3, Cm, Cout), jnp.float32) / math.sqrt(9 * Cm)

    # BatchNorm params + running stats, folded to scale/bias (eval mode)
    g1 = 1.0 + 0.1 * jax.random.normal(ks[3], (Cm,), jnp.float32)
    be1 = 0.1 * jax.random.normal(ks[4], (Cm,), jnp.float32)
    rm1 = 0.1 * jax.random.normal(ks[5], (Cm,), jnp.float32)
    rv1 = jax.random.uniform(ks[6], (Cm,), jnp.float32, minval=0.5, maxval=1.5)
    scale1 = g1 / jnp.sqrt(rv1 + eps)
    bias1 = be1 - rm1 * scale1

    g2 = 1.0 + 0.1 * jax.random.normal(ks[7], (Cout,), jnp.float32)
    be2 = 0.1 * jax.random.normal(ks[8], (Cout,), jnp.float32)
    rm2 = 0.1 * jax.random.normal(ks[9], (Cout,), jnp.float32)
    rv2 = jax.random.uniform(ks[10], (Cout,), jnp.float32, minval=0.5, maxval=1.5)
    scale2 = g2 / jnp.sqrt(rv2 + eps)
    bias2 = be2 - rm2 * scale2

    # tile_rows=4 -> 2 pooled-row tiles per image, exercising the halo/boundary logic.
    out = down_forward(x, w1, scale1, bias1, w2, scale2, bias2, tile_rows=4)
    out = jax.block_until_ready(out)

    assert out.shape == (N, Cout, H // 2, W // 2), out.shape

    ref = ref_forward(x, w1, scale1, bias1, w2, scale2, bias2)
    err = float(jnp.max(jnp.abs(out - ref)))
    # bf16 MXU operands (f32 accumulation) give ~1e-2-scale deviations vs. the f32 reference.
    assert err < 1e-1, f"max abs error vs reference too large: {err}"

    print("KERNEL_OK")
</pallas_src>

<mosaic_0001>
module attributes {stable_mosaic.version = 11 : i64} {
  func.func @down_kernel(%arg0: i32, %arg1: i32, %arg2: memref<1x12x2x12x8xf32, #tpu.memory_space<vmem>>, %arg3: memref<36x8xbf16, #tpu.memory_space<vmem>>, %arg4: memref<1x8xf32, #tpu.memory_space<vmem>>, %arg5: memref<72x128xbf16, #tpu.memory_space<vmem>>, %arg6: memref<1x128xf32, #tpu.memory_space<vmem>>, %arg7: memref<1x32x128xf32, #tpu.memory_space<vmem>>) attributes {dimension_semantics = [#tpu.dimension_semantics<parallel>, #tpu.dimension_semantics<parallel>], iteration_bounds = array<i64: 2, 2>, scalar_prefetch = 0 : i64, scratch_operands = 0 : i64, tpu.core_type = #tpu.core_type<tc>, window_params = [{transform_indices = @transform_0, window_bounds = array<i64: 1, 12, 2, 12, 8>}, {pipeline_mode = #tpu.pipeline_mode<synchronous>, transform_indices = @transform_1, window_bounds = array<i64: 36, 8>}, {pipeline_mode = #tpu.pipeline_mode<synchronous>, transform_indices = @transform_2, window_bounds = array<i64: 1, 8>}, {pipeline_mode = #tpu.pipeline_mode<synchronous>, transform_indices = @transform_3, window_bounds = array<i64: 72, 128>}, {pipeline_mode = #tpu.pipeline_mode<synchronous>, transform_indices = @transform_4, window_bounds = array<i64: 1, 128>}, {transform_indices = @transform_5, window_bounds = array<i64: 1, 32, 128>}]} {
    %c4_i32 = arith.constant 4 : i32
    %0 = arith.muli %arg1, %c4_i32 : i32
    %1 = tpu.assume_multiple %0, 4 : i32
    %c0 = arith.constant 0 : index
    %2 = arith.index_cast %1 : i32 to index
    %c0_0 = arith.constant 0 : index
    %c0_1 = arith.constant 0 : index
    %c0_2 = arith.constant 0 : index
    %3 = vector.load %arg2[%c0, %2, %c0_0, %c0_1, %c0_2] : memref<1x12x2x12x8xf32, #tpu.memory_space<vmem>>, vector<1x8x2x12x8xf32>
    %4 = vector.shape_cast %3 : vector<1x8x2x12x8xf32> to vector<8x2x12x8xf32>
    %5 = vector.extract_strided_slice %4 {offsets = [0, 0, 0, 0], sizes = [8, 1, 12, 8], strides = [1, 1, 1, 1]} : vector<8x2x12x8xf32> to vector<8x1x12x8xf32>
    %6 = vector.shape_cast %5 : vector<8x1x12x8xf32> to vector<8x12x8xf32>
    %7 = vector.extract_strided_slice %4 {offsets = [0, 1, 0, 0], sizes = [8, 1, 12, 8], strides = [1, 1, 1, 1]} : vector<8x2x12x8xf32> to vector<8x1x12x8xf32>
    %8 = vector.shape_cast %7 : vector<8x1x12x8xf32> to vector<8x12x8xf32>
    %9 = arith.maximumf %6, %8 : vector<8x12x8xf32>
    %10 = vector.extract_strided_slice %9 {offsets = [0, 0, 0], sizes = [8, 12, 4], strides = [1, 1, 1]} : vector<8x12x8xf32> to vector<8x12x4xf32>
    %11 = vector.extract_strided_slice %9 {offsets = [0, 0, 4], sizes = [8, 12, 4], strides = [1, 1, 1]} : vector<8x12x8xf32> to vector<8x12x4xf32>
    %12 = arith.maximumf %10, %11 : vector<8x12x4xf32>
    %13 = vector.extract_strided_slice %12 {offsets = [0, 0, 0], sizes = [6, 10, 4], strides = [1, 1, 1]} : vector<8x12x4xf32> to vector<6x10x4xf32>
    %14 = vector.extract_strided_slice %12 {offsets = [0, 1, 0], sizes = [6, 10, 4], strides = [1, 1, 1]} : vector<8x12x4xf32> to vector<6x10x4xf32>
    %15 = vector.extract_strided_slice %12 {offsets = [0, 2, 0], sizes = [6, 10, 4], strides = [1, 1, 1]} : vector<8x12x4xf32> to vector<6x10x4xf32>
    %16 = vector.extract_strided_slice %12 {offsets = [1, 0, 0], sizes = [6, 10, 4], strides = [1, 1, 1]} : vector<8x12x4xf32> to vector<6x10x4xf32>
    %17 = vector.extract_strided_slice %12 {offsets = [1, 1, 0], sizes = [6, 10, 4], strides = [1, 1, 1]} : vector<8x12x4xf32> to vector<6x10x4xf32>
    %18 = vector.extract_strided_slice %12 {offsets = [1, 2, 0], sizes = [6, 10, 4], strides = [1, 1, 1]} : vector<8x12x4xf32> to vector<6x10x4xf32>
    %19 = vector.extract_strided_slice %12 {offsets = [2, 0, 0], sizes = [6, 10, 4], strides = [1, 1, 1]} : vector<8x12x4xf32> to vector<6x10x4xf32>
    %20 = vector.extract_strided_slice %12 {offsets = [2, 1, 0], sizes = [6, 10, 4], strides = [1, 1, 1]} : vector<8x12x4xf32> to vector<6x10x4xf32>
    %21 = vector.extract_strided_slice %12 {offsets = [2, 2, 0], sizes = [6, 10, 4], strides = [1, 1, 1]} : vector<8x12x4xf32> to vector<6x10x4xf32>
    %22 = tpu.concatenate %13, %14, %15, %16, %17, %18, %19, %20, %21 in 2 : vector<6x10x4xf32>, vector<6x10x4xf32>, vector<6x10x4xf32>, vector<6x10x4xf32>, vector<6x10x4xf32>, vector<6x10x4xf32>, vector<6x10x4xf32>, vector<6x10x4xf32>, vector<6x10x4xf32> -> vector<6x10x36xf32>
    %23 = vector.shape_cast %22 : vector<6x10x36xf32> to vector<60x36xf32>
    %24 = arith.truncf %23 : vector<60x36xf32> to vector<60x36xbf16>
    %c0_3 = arith.constant 0 : index
    %c0_4 = arith.constant 0 : index
    %25 = vector.load %arg3[%c0_3, %c0_4] : memref<36x8xbf16, #tpu.memory_space<vmem>>, vector<36x8xbf16>
    %cst = arith.constant dense<0.000000e+00> : vector<60x8xf32>
    %26 = tpu.matmul %24, %25, %cst {dimension_numbers = #tpu.dot_dimension_numbers<[1], [0], [0], [1], [0, 0, 1, 1], [], []>} : vector<60x36xbf16>, vector<36x8xbf16>, vector<60x8xf32> -> vector<60x8xf32>
    %c0_5 = arith.constant 0 : index
    %c0_6 = arith.constant 0 : index
    %27 = vector.load %arg4[%c0_5, %c0_6] : memref<1x8xf32, #tpu.memory_space<vmem>>, vector<1x8xf32>
    %28 = vector.broadcast %27 : vector<1x8xf32> to vector<60x8xf32>
    %29 = arith.addf %26, %28 : vector<60x8xf32>
    %cst_7 = arith.constant 0.000000e+00 : f32
    %30 = vector.broadcast %cst_7 : f32 to vector<60x8xf32>
    %31 = arith.maximumf %29, %30 : vector<60x8xf32>
    %32 = vector.shape_cast %31 : vector<60x8xf32> to vector<6x10x8xf32>
    %33 = tpu.iota {dimensions = array<i32: 0>} : vector<6x1x1xi32>
    %34 = tpu.iota {dimensions = array<i32: 1>} : vector<1x10x1xi32>
    %c4_i32_8 = arith.constant 4 : i32
    %35 = arith.muli %arg1, %c4_i32_8 : i32
    %c1_i32 = arith.constant 1 : i32
    %36 = arith.subi %35, %c1_i32 : i32
    %37 = vector.broadcast %36 : i32 to vector<6x1x1xi32>
    %38 = arith.addi %37, %33 : vector<6x1x1xi32>
    %c0_i32 = arith.constant 0 : i32
    %39 = vector.broadcast %c0_i32 : i32 to vector<6x1x1xi32>
    %40 = arith.cmpi sge, %38, %39 : vector<6x1x1xi32>
    %c8_i32 = arith.constant 8 : i32
    %41 = vector.broadcast %c8_i32 : i32 to vector<6x1x1xi32>
    %42 = arith.cmpi slt, %38, %41 : vector<6x1x1xi32>
    %43 = arith.andi %40, %42 : vector<6x1x1xi1>
    %c1_i32_9 = arith.constant 1 : i32
    %44 = vector.broadcast %c1_i32_9 : i32 to vector<1x10x1xi32>
    %45 = arith.cmpi sge, %34, %44 : vector<1x10x1xi32>
    %46 = vector.broadcast %43 : vector<6x1x1xi1> to vector<6x10x1xi1>
    %47 = vector.broadcast %45 : vector<1x10x1xi1> to vector<6x10x1xi1>
    %48 = arith.andi %46, %47 : vector<6x10x1xi1>
    %c8_i32_10 = arith.constant 8 : i32
    %49 = vector.broadcast %c8_i32_10 : i32 to vector<1x10x1xi32>
    %50 = arith.cmpi sle, %34, %49 : vector<1x10x1xi32>
    %51 = vector.broadcast %50 : vector<1x10x1xi1> to vector<6x10x1xi1>
    %52 = arith.andi %48, %51 : vector<6x10x1xi1>
    %cst_11 = arith.constant 0.000000e+00 : f32
    %53 = vector.shape_cast %52 : vector<6x10x1xi1> to vector<6x10x1xi1>
    %54 = vector.broadcast %53 : vector<6x10x1xi1> to vector<6x10x8xi1>
    %55 = vector.broadcast %cst_11 : f32 to vector<6x10x8xf32>
    %56 = arith.select %54, %32, %55 : vector<6x10x8xi1>, vector<6x10x8xf32>
    %57 = vector.extract_strided_slice %56 {offsets = [0, 0, 0], sizes = [4, 8, 8], strides = [1, 1, 1]} : vector<6x10x8xf32> to vector<4x8x8xf32>
    %58 = vector.extract_strided_slice %56 {offsets = [0, 1, 0], sizes = [4, 8, 8], strides = [1, 1, 1]} : vector<6x10x8xf32> to vector<4x8x8xf32>
    %59 = vector.extract_strided_slice %56 {offsets = [0, 2, 0], sizes = [4, 8, 8], strides = [1, 1, 1]} : vector<6x10x8xf32> to vector<4x8x8xf32>
    %60 = vector.extract_strided_slice %56 {offsets = [1, 0, 0], sizes = [4, 8, 8], strides = [1, 1, 1]} : vector<6x10x8xf32> to vector<4x8x8xf32>
    %61 = vector.extract_strided_slice %56 {offsets = [1, 1, 0], sizes = [4, 8, 8], strides = [1, 1, 1]} : vector<6x10x8xf32> to vector<4x8x8xf32>
    %62 = vector.extract_strided_slice %56 {offsets = [1, 2, 0], sizes = [4, 8, 8], strides = [1, 1, 1]} : vector<6x10x8xf32> to vector<4x8x8xf32>
    %63 = vector.extract_strided_slice %56 {offsets = [2, 0, 0], sizes = [4, 8, 8], strides = [1, 1, 1]} : vector<6x10x8xf32> to vector<4x8x8xf32>
    %64 = vector.extract_strided_slice %56 {offsets = [2, 1, 0], sizes = [4, 8, 8], strides = [1, 1, 1]} : vector<6x10x8xf32> to vector<4x8x8xf32>
    %65 = vector.extract_strided_slice %56 {offsets = [2, 2, 0], sizes = [4, 8, 8], strides = [1, 1, 1]} : vector<6x10x8xf32> to vector<4x8x8xf32>
    %66 = tpu.concatenate %57, %58, %59, %60, %61, %62, %63, %64, %65 in 2 : vector<4x8x8xf32>, vector<4x8x8xf32>, vector<4x8x8xf32>, vector<4x8x8xf32>, vector<4x8x8xf32>, vector<4x8x8xf32>, vector<4x8x8xf32>, vector<4x8x8xf32>, vector<4x8x8xf32> -> vector<4x8x72xf32>
    %67 = vector.shape_cast %66 : vector<4x8x72xf32> to vector<32x72xf32>
    %68 = arith.truncf %67 : vector<32x72xf32> to vector<32x72xbf16>
    %c0_12 = arith.constant 0 : index
    %c0_13 = arith.constant 0 : index
    %69 = vector.load %arg5[%c0_12, %c0_13] : memref<72x128xbf16, #tpu.memory_space<vmem>>, vector<72x128xbf16>
    %cst_14 = arith.constant dense<0.000000e+00> : vector<32x128xf32>
    %70 = tpu.matmul %68, %69, %cst_14 {dimension_numbers = #tpu.dot_dimension_numbers<[1], [0], [0], [1], [0, 0, 1, 1], [], []>} : vector<32x72xbf16>, vector<72x128xbf16>, vector<32x128xf32> -> vector<32x128xf32>
    %c0_15 = arith.constant 0 : index
    %c0_16 = arith.constant 0 : index
    %71 = vector.load %arg6[%c0_15, %c0_16] : memref<1x128xf32, #tpu.memory_space<vmem>>, vector<1x128xf32>
    %72 = vector.broadcast %71 : vector<1x128xf32> to vector<32x128xf32>
    %73 = arith.addf %70, %72 : vector<32x128xf32>
    %cst_17 = arith.constant 0.000000e+00 : f32
    %74 = vector.broadcast %cst_17 : f32 to vector<32x128xf32>
    %75 = arith.maximumf %73, %74 : vector<32x128xf32>
    %c0_18 = arith.constant 0 : index
    %c0_19 = arith.constant 0 : index
    %c0_20 = arith.constant 0 : index
    %76 = vector.load %arg7[%c0_18, %c0_19, %c0_20] : memref<1x32x128xf32, #tpu.memory_space<vmem>>, vector<1x32x128xf32>
    %77 = vector.shape_cast %76 : vector<1x32x128xf32> to vector<32x128xf32>
    %78 = vector.shape_cast %75 : vector<32x128xf32> to vector<1x32x128xf32>
    tpu.vector_store %arg7[%c0_18, %c0_19, %c0_20], %78 {strides = array<i32>} : memref<1x32x128xf32, #tpu.memory_space<vmem>>, vector<1x32x128xf32>,
    return
  }
  func.func @transform_0(%arg0: i32, %arg1: i32) -> (i32, i32, i32, i32, i32) {
    %c0_i32 = arith.constant 0 : i32
    %c0_i32_0 = arith.constant 0 : i32
    %c0_i32_1 = arith.constant 0 : i32
    %c0_i32_2 = arith.constant 0 : i32
    %c0_i32_3 = arith.constant 0 : i32
    return %arg0, %c0_i32, %c0_i32_0, %c0_i32_1, %c0_i32_2 : i32, i32, i32, i32, i32
  }
  func.func @transform_1(%arg0: i32, %arg1: i32) -> (i32, i32) {
    %c0_i32 = arith.constant 0 : i32
    %c0_i32_0 = arith.constant 0 : i32
    %c0_i32_1 = arith.constant 0 : i32
    return %c0_i32, %c0_i32_0 : i32, i32
  }
  func.func @transform_2(%arg0: i32, %arg1: i32) -> (i32, i32) {
    %c0_i32 = arith.constant 0 : i32
    %c0_i32_0 = arith.constant 0 : i32
    %c0_i32_1 = arith.constant 0 : i32
    return %c0_i32, %c0_i32_0 : i32, i32
  }
  func.func @transform_3(%arg0: i32, %arg1: i32) -> (i32, i32) {
    %c0_i32 = arith.constant 0 : i32
    %c0_i32_0 = arith.constant 0 : i32
    %c0_i32_1 = arith.constant 0 : i32
    return %c0_i32, %c0_i32_0 : i32, i32
  }
  func.func @transform_4(%arg0: i32, %arg1: i32) -> (i32, i32) {
    %c0_i32 = arith.constant 0 : i32
    %c0_i32_0 = arith.constant 0 : i32
    %c0_i32_1 = arith.constant 0 : i32
    return %c0_i32, %c0_i32_0 : i32, i32
  }
  func.func @transform_5(%arg0: i32, %arg1: i32) -> (i32, i32, i32) {
    %c0_i32 = arith.constant 0 : i32
    %c0_i32_0 = arith.constant 0 : i32
    return %arg0, %arg1, %c0_i32 : i32, i32, i32
  }
}

</mosaic_0001>

<llo_original>
// kernel: tpu_custom_call.1
$region0: #{tpu_custom_call.1}
  #allocation0 [shape = 'u32[]', space=smem, size = 0x4, offset = 0x4, fixed_abs, tag = 'smem constant byte address 0x4 - core index']
  #allocation1 [shape = 'u32[72,128]{1,0:T(1,128)}', space=vmem, size = 0x9000, scoped, tag = 'internal scratch']
  %s0 = inlined_call_operand.vmem [shape: f32[2,12,2,12,8], index: 0, kind: input, shape index: {}]
  %s1 = inlined_call_operand.vmem [shape: bf16[36,8], index: 1, kind: input, shape index: {}]
  %s2 = inlined_call_operand.vmem [shape: f32[1,8], index: 2, kind: input, shape index: {}]
  %s3 = inlined_call_operand.vmem [shape: bf16[72,128], index: 3, kind: input, shape index: {}]
  %s4 = inlined_call_operand.vmem [shape: f32[1,128], index: 4, kind: input, shape index: {}]
  %s5 = inlined_call_operand.hbm [shape: f32[2,64,128], index: 5, kind: output, shape index: {}]
  %s6 = sld [smem:[#allocation0]]
  $region53: #{tpu_custom_call.1} parent=0
    _
  %s8 = ssub.s32 1, %s6
  %s9 = scalar_select 0, %s8, %s6
  $region1: #{tpu_custom_call.1} parent=0
    #allocation2 [shape = 'u8[32768]{0}', space=vmem, size = 0x8000, scoped, tag = 'output window, operand 0']
    #allocation3 [shape = 's32[2]{0}', space=sflag, size = 0x8, scoped, tag = 'scoped memory for tpu_custom_call.1']
    %10 = vsyncpa [#allocation3], 0
    %s11 = scalar_lea.sflag [#allocation3], 1
    %12 = vsyncpa %s11, 0
    loop: start=0, step=1, limit=6
    $region2: #{tpu_custom_call.1} parent=1 // loop_pre_header
      _
    $region3: #{tpu_custom_call.1} parent=1 // loop_header
      %s14 = sphi 0, %s18
      %p15 = scmp.ge.s32.totalorder %s14, 6
      %s21 = sphi 0, %s33
      %s22 = sphi 0, %s29
      %s23 = sphi 0, %s21
      %s24 = sphi 0, %s22
      %s25 = sphi 0, %s23
      %s26 = sphi 0, %s24
      %s36 = sphi 0, %s38
      %s39 = sphi 0, %s36
      %s40 = sphi 0, %s39
      %s56 = sphi 0, %s40
      %s60 = sphi 0, %s60
      %s62 = sphi 0, %s60
      %s63 = sphi 0, %s62
      %s77 = sphi 0, %s63
      %s81 = sphi 0, %s81
      %s83 = sphi 0, %s81
      %s84 = sphi 0, %s83
      %s98 = sphi 0, %s84
      %s102 = sphi 0, %s102
      %s104 = sphi 0, %s102
      %s105 = sphi 0, %s104
      %s119 = sphi 0, %s105
      %s123 = sphi 0, %s123
      %s125 = sphi 0, %s123
      %s126 = sphi 0, %s125
      %s140 = sphi 0, %s126
      %s148 = sphi 0, %s150
      %s151 = sphi 0, %s148
      %s152 = sphi 0, %s151
      %s168 = sphi 0, %s152
    $region4: #{tpu_custom_call.1} parent=1 // loop_header_branch
      %17 = sbr.rel (%p15) target = $region8
    $region5: #{tpu_custom_call.1} parent=1 // loop_body
      %s19 = ssub.s32 %s14, 1
      %s20 = ssub.s32 %s14, 2
      %s27 = sadd.s32 1, %s22
      %p28 = scmp.ge.s32.totalorder %s27, 2
      %s29 = scalar_select %p28, 0, %s27
      %s30 = sadd.s32 1, %s21
      %s31 = scalar_select %p28, %s30, %s21
      %p32 = scmp.ge.s32.totalorder %s31, 2
      %s33 = scalar_select %p32, 0, %s31
      %s34 = ssub.s32 %s21, %s33
      %p35 = scmp.eq.s32.totalorder %s34, 0
      %s37 = sadd.s32 %s36, 1
      %s38 = scalar_select %p35, %s36, %s37
      %p41 = pneg %p35
      %p42 = scmp.eq.s32.totalorder %s14, 3
      %p43 = por %p41, %p42
      %p44 = scmp.ne.s32.totalorder %s36, %s39
      %p45 = scmp.eq.s32.totalorder %s14, 0
      %p46 = por %p44, %p45
      %p47 = scmp.ne.s32.totalorder %s36, %s39
      %p48 = scmp.eq.s32.totalorder %s19, 3
      %p49 = por %p47, %p48
      %p50 = scmp.ne.s32.totalorder %s39, %s40
      %p51 = scmp.eq.s32.totalorder %s19, 0
      %p52 = por %p50, %p51
      %p53 = scmp.ne.s32.totalorder %s39, %s40
      %p54 = scmp.eq.s32.totalorder %s20, 3
      %p55 = por %p53, %p54
      %p57 = scmp.ne.s32.totalorder %s40, %s56
      %p58 = scmp.eq.s32.totalorder %s20, 0
      %p59 = por %p57, %p58
      %s61 = sadd.s32 %s60, 1
      %p64 = scmp.eq.s32.totalorder %s14, 3
      %p65 = scmp.ne.s32.totalorder %s60, %s62
      %p66 = scmp.eq.s32.totalorder %s14, 0
      %p67 = por %p65, %p66
      %p68 = scmp.ne.s32.totalorder %s60, %s62
      %p69 = scmp.eq.s32.totalorder %s19, 3
      %p70 = por %p68, %p69
      %p71 = scmp.ne.s32.totalorder %s62, %s63
      %p72 = scmp.eq.s32.totalorder %s19, 0
      %p73 = por %p71, %p72
      %p74 = scmp.ne.s32.totalorder %s62, %s63
      %p75 = scmp.eq.s32.totalorder %s20, 3
      %p76 = por %p74, %p75
      %p78 = scmp.ne.s32.totalorder %s63, %s77
      %p79 = scmp.eq.s32.totalorder %s20, 0
      %p80 = por %p78, %p79
      %s82 = sadd.s32 %s81, 1
      %p85 = scmp.eq.s32.totalorder %s14, 3
      %p86 = scmp.ne.s32.totalorder %s81, %s83
      %p87 = scmp.eq.s32.totalorder %s14, 0
      %p88 = por %p86, %p87
      %p89 = scmp.ne.s32.totalorder %s81, %s83
      %p90 = scmp.eq.s32.totalorder %s19, 3
      %p91 = por %p89, %p90
      %p92 = scmp.ne.s32.totalorder %s83, %s84
      %p93 = scmp.eq.s32.totalorder %s19, 0
      %p94 = por %p92, %p93
      %p95 = scmp.ne.s32.totalorder %s83, %s84
      %p96 = scmp.eq.s32.totalorder %s20, 3
      %p97 = por %p95, %p96
      %p99 = scmp.ne.s32.totalorder %s84, %s98
      %p100 = scmp.eq.s32.totalorder %s20, 0
      %p101 = por %p99, %p100
      %s103 = sadd.s32 %s102, 1
      %p106 = scmp.eq.s32.totalorder %s14, 3
      %p107 = scmp.ne.s32.totalorder %s102, %s104
      %p108 = scmp.eq.s32.totalorder %s14, 0
      %p109 = por %p107, %p108
      %p110 = scmp.ne.s32.totalorder %s102, %s104
      %p111 = scmp.eq.s32.totalorder %s19, 3
      %p112 = por %p110, %p111
      %p113 = scmp.ne.s32.totalorder %s104, %s105
      %p114 = scmp.eq.s32.totalorder %s19, 0
      %p115 = por %p113, %p114
      %p116 = scmp.ne.s32.totalorder %s104, %s105
      %p117 = scmp.eq.s32.totalorder %s20, 3
      %p118 = por %p116, %p117
      %p120 = scmp.ne.s32.totalorder %s105, %s119
      %p121 = scmp.eq.s32.totalorder %s20, 0
      %p122 = por %p120, %p121
      %s124 = sadd.s32 %s123, 1
      %p127 = scmp.eq.s32.totalorder %s14, 3
      %p128 = scmp.ne.s32.totalorder %s123, %s125
      %p129 = scmp.eq.s32.totalorder %s14, 0
      %p130 = por %p128, %p129
      %p131 = scmp.ne.s32.totalorder %s123, %s125
      %p132 = scmp.eq.s32.totalorder %s19, 3
      %p133 = por %p131, %p132
      %p134 = scmp.ne.s32.totalorder %s125, %s126
      %p135 = scmp.eq.s32.totalorder %s19, 0
      %p136 = por %p134, %p135
      %p137 = scmp.ne.s32.totalorder %s125, %s126
      %p138 = scmp.eq.s32.totalorder %s20, 3
      %p139 = por %p137, %p138
      %p141 = scmp.ne.s32.totalorder %s126, %s140
      %p142 = scmp.eq.s32.totalorder %s20, 0
      %p143 = por %p141, %p142
      %s144 = ssub.s32 %s21, %s33
      %s145 = ssub.s32 %s22, %s29
      %s146 = sor.u32 %s144, %s145
      %p147 = scmp.eq.s32.totalorder %s146, 0
      %s149 = sadd.s32 %s148, 1
      %s150 = scalar_select %p147, %s148, %s149
      %p153 = pneg %p147
      %p154 = scmp.eq.s32.totalorder %s14, 3
      %p155 = por %p153, %p154
      %p156 = scmp.ne.s32.totalorder %s148, %s151
      %p157 = scmp.eq.s32.totalorder %s14, 0
      %p158 = por %p156, %p157
      %p159 = scmp.ne.s32.totalorder %s148, %s151
      %p160 = scmp.eq.s32.totalorder %s19, 3
      %p161 = por %p159, %p160
      %p162 = scmp.ne.s32.totalorder %s151, %s152
      %p163 = scmp.eq.s32.totalorder %s19, 0
      %p164 = por %p162, %p163
      %p165 = scmp.ne.s32.totalorder %s151, %s152
      %p166 = scmp.eq.s32.totalorder %s20, 3
      %p167 = por %p165, %p166
      %p169 = scmp.ne.s32.totalorder %s152, %s168
      %p170 = scmp.eq.s32.totalorder %s20, 0
      %p171 = por %p169, %p170
      %p172 = scmp.le.s32.totalorder 1, %s14
      %p173 = scmp.lt.s32.totalorder %s14, 5
      %p174 = pnand %p172, %p173
      %p175 = pneg %p174
      // Predicated region
      $region9: #{tpu_custom_call.1} parent=5 // pred_check
        _
      $region10: #{tpu_custom_call.1} parent=5 // pred_check_branch
        %177 = sbr.rel (%p174) target = $region12
      $region11: #{tpu_custom_call.1} parent=5 // pred_region
        %s178 = ssub.s32 %s14, 1
        // Predicated region
        $region13: #{tpu_custom_call.1} parent=11 // pred_check
          %p179 = pneg %p73
        $region14: #{tpu_custom_call.1} parent=11 // pred_check_branch
          %181 = sbr.rel (%p179) target = $region16
        $region15: #{tpu_custom_call.1} parent=11 // pred_region
          _
        $region16: #{tpu_custom_call.1} parent=11 // pred_fallthru
          _
        // Predicated region
        $region17: #{tpu_custom_call.1} parent=11 // pred_check
          %p182 = pneg %p94
        $region18: #{tpu_custom_call.1} parent=11 // pred_check_branch
          %184 = sbr.rel (%p182) target = $region20
        $region19: #{tpu_custom_call.1} parent=11 // pred_region
          _
        $region20: #{tpu_custom_call.1} parent=11 // pred_fallthru
          _
        // Predicated region
        $region21: #{tpu_custom_call.1} parent=11 // pred_check
          %p185 = pneg %p115
        $region22: #{tpu_custom_call.1} parent=11 // pred_check_branch
          %187 = sbr.rel (%p185) target = $region24
        $region23: #{tpu_custom_call.1} parent=11 // pred_region
          _
        $region24: #{tpu_custom_call.1} parent=11 // pred_fallthru
          _
        // Predicated region
        $region25: #{tpu_custom_call.1} parent=11 // pred_check
          %p188 = pneg %p136
        $region26: #{tpu_custom_call.1} parent=11 // pred_check_branch
          %190 = sbr.rel (%p188) target = $region28
        $region27: #{tpu_custom_call.1} parent=11 // pred_region
          _
        $region28: #{tpu_custom_call.1} parent=11 // pred_fallthru
          _
      $region12: #{tpu_custom_call.1} parent=5 // pred_fallthru
        _
      %p191 = scmp.lt.s32.totalorder %s14, 4
      // Predicated region
      $region29: #{tpu_custom_call.1} parent=5 // pred_check
        %p192 = pneg %p191
      $region30: #{tpu_custom_call.1} parent=5 // pred_check_branch
        %194 = sbr.rel (%p192) target = $region32
      $region31: #{tpu_custom_call.1} parent=5 // pred_region
        // Predicated region
        $region33: #{tpu_custom_call.1} parent=31 // pred_check
          %p195 = pneg %p46
        $region34: #{tpu_custom_call.1} parent=31 // pred_check_branch
          %197 = sbr.rel (%p195) target = $region36
        $region35: #{tpu_custom_call.1} parent=31 // pred_region
          %p198 = scmp.lt.s32.totalorder %s21, 1
          %s199 = scalar_select %p198, %s21, 1
          %s200 = smul.addr %s199, 48
          %s201 = smul.addr %s200, 8
          %s202 = scalar_lea.vmem %s0, %s201
        $region36: #{tpu_custom_call.1} parent=31 // pred_fallthru
          _
      $region32: #{tpu_custom_call.1} parent=5 // pred_fallthru
        _
      %p203 = scmp.le.s32.totalorder 1, %s14
      %p204 = scmp.lt.s32.totalorder %s14, 5
      %p205 = pnand %p203, %p204
      %p206 = pneg %p205
      // Predicated region
      $region37: #{tpu_custom_call.1} parent=5 // pred_check
        _
      $region38: #{tpu_custom_call.1} parent=5 // pred_check_branch
        %208 = sbr.rel (%p205) target = $region40
      $region39: #{tpu_custom_call.1} parent=5 // pred_region
        %s209 = ssub.s32 %s14, 1
        %p210 = scmp.lt.s32.totalorder %s23, 1
        %s211 = scalar_select %p210, %s23, 1
        %s212 = smul.addr %s211, 48
        %s213 = smul.addr %s212, 8
        %s214 = scalar_lea.vmem %s0, %s213
        %p215 = pneg %p52
        %p216 = pneg %p49
        %p217 = pneg %p73
        %p218 = pneg %p70
        %p219 = pneg %p94
        %p220 = pneg %p91
        %p221 = pneg %p115
        %p222 = pneg %p112
        %p223 = pneg %p136
        %p224 = pneg %p133
        %p225 = pneg %p164
        %p226 = pneg %p161
        %s227 = sand.u32 %s151, 1
        %s228 = scalar_lea.sflag [#allocation3], %s227
        %s229 = sand.u32 %s151, 1
        %s230 = smul.addr %s229, 32
        %s231 = scalar_lea.vmem [#allocation2], %s230
        %p232 = scmp.lt.s32.totalorder %s23, 1
        %s233 = scalar_select %p232, %s23, 1
        %s234 = smul.addr %s233, 48
        %s235 = smul.addr %s234, 8
        %s236 = scalar_lea.vmem %s0, %s235
        %s237 = smul.u32 4, %s24
        %s239 = smul.u32 %s24, 4
        %s240 = smul.u32 %s239, 32
        %s241 = scalar_lea.vmem %s236, %s240
        %v242 = vld [vmem:[%s241] sm:$0xff]
        %v243 = vld [vmem:[%s241 + $0x8] sm:$0xf]
        %v244 = vld [vmem:[%s241 + $0x10] sm:$0xff]
        %v245 = vld [vmem:[%s241 + $0x18] sm:$0xf]
        %v246 = vld [vmem:[%s241 + $0x20] sm:$0xff]
        %v247 = vld [vmem:[%s241 + $0x28] sm:$0xf]
        %v248 = vld [vmem:[%s241 + $0x30] sm:$0xff]
        %v249 = vld [vmem:[%s241 + $0x38] sm:$0xf]
        %v250 = vld [vmem:[%s241 + $0x40] sm:$0xff]
        %v251 = vld [vmem:[%s241 + $0x48] sm:$0xf]
        %v252 = vld [vmem:[%s241 + $0x50] sm:$0xff]
        %v253 = vld [vmem:[%s241 + $0x58] sm:$0xf]
        %v254 = vld [vmem:[%s241 + $0x60] sm:$0xff]
        %v255 = vld [vmem:[%s241 + $0x68] sm:$0xf]
        %v256 = vld [vmem:[%s241 + $0x70] sm:$0xff]
        %v257 = vld [vmem:[%s241 + $0x78] sm:$0xf]
        %v258 = vld [vmem:[%s241 + $0x80] sm:$0xff]
        %v259 = vld [vmem:[%s241 + $0x88] sm:$0xf]
        %v260 = vld [vmem:[%s241 + $0x90] sm:$0xff]
        %v261 = vld [vmem:[%s241 + $0x98] sm:$0xf]
        %v262 = vld [vmem:[%s241 + $0xa0] sm:$0xff]
        %v263 = vld [vmem:[%s241 + $0xa8] sm:$0xf]
        %v264 = vld [vmem:[%s241 + $0xb0] sm:$0xff]
        %v265 = vld [vmem:[%s241 + $0xb8] sm:$0xf]
        %v266 = vld [vmem:[%s241 + $0xc0] sm:$0xff]
        %v267 = vld [vmem:[%s241 + $0xc8] sm:$0xf]
        %v268 = vld [vmem:[%s241 + $0xd0] sm:$0xff]
        %v269 = vld [vmem:[%s241 + $0xd8] sm:$0xf]
        %v270 = vld [vmem:[%s241 + $0xe0] sm:$0xff]
        %v271 = vld [vmem:[%s241 + $0xe8] sm:$0xf]
        %v272 = vld [vmem:[%s241 + $0xf0] sm:$0xff]
        %v273 = vld [vmem:[%s241 + $0xf8] sm:$0xf]
        %v274 = vmax.f32 %v242, %v244
        %v275 = vmax.f32 %v243, %v245
        %v276 = vmax.f32 %v246, %v248
        %v277 = vmax.f32 %v247, %v249
        %v278 = vmax.f32 %v250, %v252
        %v279 = vmax.f32 %v251, %v253
        %v280 = vmax.f32 %v254, %v256
        %v281 = vmax.f32 %v255, %v257
        %v282 = vmax.f32 %v258, %v260
        %v283 = vmax.f32 %v259, %v261
        %v284 = vmax.f32 %v262, %v264
        %v285 = vmax.f32 %v263, %v265
        %v286 = vmax.f32 %v266, %v268
        %v287 = vmax.f32 %v267, %v269
        %v288 = vmax.f32 %v270, %v272
        %v289 = vmax.f32 %v271, %v273
        %306 = vrot.lane.b32.xlu0 %v274, 124
        %v307 = vpop.permute.xlu0 %306
        %308 = vrot.lane.b32.xlu0 %v275, 124
        %v309 = vpop.permute.xlu0 %308
        %310 = vrot.lane.b32.xlu0 %v276, 124
        %v311 = vpop.permute.xlu0 %310
        %312 = vrot.lane.b32.xlu0 %v277, 124
        %v313 = vpop.permute.xlu0 %312
        %314 = vrot.lane.b32.xlu0 %v278, 124
        %v315 = vpop.permute.xlu0 %314
        %316 = vrot.lane.b32.xlu0 %v279, 124
        %v317 = vpop.permute.xlu0 %316
        %318 = vrot.lane.b32.xlu0 %v280, 124
        %v319 = vpop.permute.xlu0 %318
        %320 = vrot.lane.b32.xlu0 %v281, 124
        %v321 = vpop.permute.xlu0 %320
        %322 = vrot.lane.b32.xlu0 %v282, 124
        %v323 = vpop.permute.xlu0 %322
        %324 = vrot.lane.b32.xlu0 %v283, 124
        %v325 = vpop.permute.xlu0 %324
        %326 = vrot.lane.b32.xlu0 %v284, 124
        %v327 = vpop.permute.xlu0 %326
        %328 = vrot.lane.b32.xlu0 %v285, 124
        %v329 = vpop.permute.xlu0 %328
        %330 = vrot.lane.b32.xlu0 %v286, 124
        %v331 = vpop.permute.xlu0 %330
        %332 = vrot.lane.b32.xlu0 %v287, 124
        %v333 = vpop.permute.xlu0 %332
        %334 = vrot.lane.b32.xlu0 %v288, 124
        %v335 = vpop.permute.xlu0 %334
        %336 = vrot.lane.b32.xlu0 %v289, 124
        %v337 = vpop.permute.xlu0 %336
        %v354 = vmax.f32 %v274, %v307
        %v355 = vmax.f32 %v275, %v309
        %v356 = vmax.f32 %v276, %v311
        %v357 = vmax.f32 %v277, %v313
        %v358 = vmax.f32 %v278, %v315
        %v359 = vmax.f32 %v279, %v317
        %v360 = vmax.f32 %v280, %v319
        %v361 = vmax.f32 %v281, %v321
        %v362 = vmax.f32 %v282, %v323
        %v363 = vmax.f32 %v283, %v325
        %v364 = vmax.f32 %v284, %v327
        %v365 = vmax.f32 %v285, %v329
        %v366 = vmax.f32 %v286, %v331
        %v367 = vmax.f32 %v287, %v333
        %v368 = vmax.f32 %v288, %v335
        %v369 = vmax.f32 %v289, %v337
        %vm382 = vcmask 1046528
        %v383 = vrot.slane %v354, 1
        %v384 = vrot.slane %v355, 1
        %v385 = vsel %vm382, %v383, %v384
        %v386 = vrot.slane %v356, 1
        %v387 = vrot.slane %v357, 1
        %v388 = vsel %vm382, %v386, %v387
        %v389 = vrot.slane %v358, 1
        %v390 = vrot.slane %v359, 1
        %v391 = vsel %vm382, %v389, %v390
        %v392 = vrot.slane %v360, 1
        %v393 = vrot.slane %v361, 1
        %v394 = vsel %vm382, %v392, %v393
        %v395 = vrot.slane %v362, 1
        %v396 = vrot.slane %v363, 1
        %v397 = vsel %vm382, %v395, %v396
        %v398 = vrot.slane %v364, 1
        %v399 = vrot.slane %v365, 1
        %v400 = vsel %vm382, %v398, %v399
        %401 = vrot.lane.b32.xlu0 %v385, 4
        %v402 = vpop.permute.xlu0 %401
        %403 = vrot.lane.b32.xlu0 %v384, 4
        %v404 = vpop.permute.xlu0 %403
        %405 = vrot.lane.b32.xlu0 %v388, 4
        %v406 = vpop.permute.xlu0 %405
        %407 = vrot.lane.b32.xlu0 %v387, 4
        %v408 = vpop.permute.xlu0 %407
        %409 = vrot.lane.b32.xlu0 %v391, 4
        %v410 = vpop.permute.xlu0 %409
        %411 = vrot.lane.b32.xlu0 %v390, 4
        %v412 = vpop.permute.xlu0 %411
        %413 = vrot.lane.b32.xlu0 %v394, 4
        %v414 = vpop.permute.xlu0 %413
        %415 = vrot.lane.b32.xlu0 %v393, 4
        %v416 = vpop.permute.xlu0 %415
        %417 = vrot.lane.b32.xlu0 %v397, 4
        %v418 = vpop.permute.xlu0 %417
        %419 = vrot.lane.b32.xlu0 %v396, 4
        %v420 = vpop.permute.xlu0 %419
        %421 = vrot.lane.b32.xlu0 %v400, 4
        %v422 = vpop.permute.xlu0 %421
        %423 = vrot.lane.b32.xlu0 %v399, 4
        %v424 = vpop.permute.xlu0 %423
        %vm437 = vcmask 1045504
        %v438 = vrot.slane %v354, 2
        %v439 = vrot.slane %v355, 2
        %v440 = vsel %vm437, %v438, %v439
        %v441 = vrot.slane %v356, 2
        %v442 = vrot.slane %v357, 2
        %v443 = vsel %vm437, %v441, %v442
        %v444 = vrot.slane %v358, 2
        %v445 = vrot.slane %v359, 2
        %v446 = vsel %vm437, %v444, %v445
        %v447 = vrot.slane %v360, 2
        %v448 = vrot.slane %v361, 2
        %v449 = vsel %vm437, %v447, %v448
        %v450 = vrot.slane %v362, 2
        %v451 = vrot.slane %v363, 2
        %v452 = vsel %vm437, %v450, %v451
        %v453 = vrot.slane %v364, 2
        %v454 = vrot.slane %v365, 2
        %v455 = vsel %vm437, %v453, %v454
        %456 = vrot.lane.b32.xlu0 %v440, 8
        %v457 = vpop.permute.xlu0 %456
        %458 = vrot.lane.b32.xlu0 %v439, 8
        %v459 = vpop.permute.xlu0 %458
        %460 = vrot.lane.b32.xlu0 %v443, 8
        %v461 = vpop.permute.xlu0 %460
        %462 = vrot.lane.b32.xlu0 %v442, 8
        %v463 = vpop.permute.xlu0 %462
        %464 = vrot.lane.b32.xlu0 %v446, 8
        %v465 = vpop.permute.xlu0 %464
        %466 = vrot.lane.b32.xlu0 %v445, 8
        %v467 = vpop.permute.xlu0 %466
        %468 = vrot.lane.b32.xlu0 %v449, 8
        %v469 = vpop.permute.xlu0 %468
        %470 = vrot.lane.b32.xlu0 %v448, 8
        %v471 = vpop.permute.xlu0 %470
        %472 = vrot.lane.b32.xlu0 %v452, 8
        %v473 = vpop.permute.xlu0 %472
        %474 = vrot.lane.b32.xlu0 %v451, 8
        %v475 = vpop.permute.xlu0 %474
        %476 = vrot.lane.b32.xlu0 %v455, 8
        %v477 = vpop.permute.xlu0 %476
        %478 = vrot.lane.b32.xlu0 %v454, 8
        %v479 = vpop.permute.xlu0 %478
        %494 = vrot.lane.b32.xlu0 %v356, 12
        %v495 = vpop.permute.xlu0 %494
        %496 = vrot.lane.b32.xlu0 %v357, 12
        %v497 = vpop.permute.xlu0 %496
        %498 = vrot.lane.b32.xlu0 %v358, 12
        %v499 = vpop.permute.xlu0 %498
        %500 = vrot.lane.b32.xlu0 %v359, 12
        %v501 = vpop.permute.xlu0 %500
        %502 = vrot.lane.b32.xlu0 %v360, 12
        %v503 = vpop.permute.xlu0 %502
        %504 = vrot.lane.b32.xlu0 %v361, 12
        %v505 = vpop.permute.xlu0 %504
        %506 = vrot.lane.b32.xlu0 %v362, 12
        %v507 = vpop.permute.xlu0 %506
        %508 = vrot.lane.b32.xlu0 %v363, 12
        %v509 = vpop.permute.xlu0 %508
        %510 = vrot.lane.b32.xlu0 %v364, 12
        %v511 = vpop.permute.xlu0 %510
        %512 = vrot.lane.b32.xlu0 %v365, 12
        %v513 = vpop.permute.xlu0 %512
        %514 = vrot.lane.b32.xlu0 %v366, 12
        %v515 = vpop.permute.xlu0 %514
        %516 = vrot.lane.b32.xlu0 %v367, 12
        %v517 = vpop.permute.xlu0 %516
        %v530 = vrot.slane %v366, 1
        %v531 = vrot.slane %v367, 1
        %v532 = vsel %vm382, %v530, %v531
        %533 = vrot.lane.b32.xlu0 %v388, 16
        %v534 = vpop.permute.xlu0 %533
        %535 = vrot.lane.b32.xlu0 %v387, 16
        %v536 = vpop.permute.xlu0 %535
        %537 = vrot.lane.b32.xlu0 %v391, 16
        %v538 = vpop.permute.xlu0 %537
        %539 = vrot.lane.b32.xlu0 %v390, 16
        %v540 = vpop.permute.xlu0 %539
        %541 = vrot.lane.b32.xlu0 %v394, 16
        %v542 = vpop.permute.xlu0 %541
        %543 = vrot.lane.b32.xlu0 %v393, 16
        %v544 = vpop.permute.xlu0 %543
        %545 = vrot.lane.b32.xlu0 %v397, 16
        %v546 = vpop.permute.xlu0 %545
        %547 = vrot.lane.b32.xlu0 %v396, 16
        %v548 = vpop.permute.xlu0 %547
        %549 = vrot.lane.b32.xlu0 %v400, 16
        %v550 = vpop.permute.xlu0 %549
        %551 = vrot.lane.b32.xlu0 %v399, 16
        %v552 = vpop.permute.xlu0 %551
        %553 = vrot.lane.b32.xlu0 %v532, 16
        %v554 = vpop.permute.xlu0 %553
        %555 = vrot.lane.b32.xlu0 %v531, 16
        %v556 = vpop.permute.xlu0 %555
        %v569 = vrot.slane %v366, 2
        %v570 = vrot.slane %v367, 2
        %v571 = vsel %vm437, %v569, %v570
        %572 = vrot.lane.b32.xlu0 %v443, 20
        %v573 = vpop.permute.xlu0 %572
        %574 = vrot.lane.b32.xlu0 %v442, 20
        %v575 = vpop.permute.xlu0 %574
        %576 = vrot.lane.b32.xlu0 %v446, 20
        %v577 = vpop.permute.xlu0 %576
        %578 = vrot.lane.b32.xlu0 %v445, 20
        %v579 = vpop.permute.xlu0 %578
        %580 = vrot.lane.b32.xlu0 %v449, 20
        %v581 = vpop.permute.xlu0 %580
        %582 = vrot.lane.b32.xlu0 %v448, 20
        %v583 = vpop.permute.xlu0 %582
        %584 = vrot.lane.b32.xlu0 %v452, 20
        %v585 = vpop.permute.xlu0 %584
        %586 = vrot.lane.b32.xlu0 %v451, 20
        %v587 = vpop.permute.xlu0 %586
        %588 = vrot.lane.b32.xlu0 %v455, 20
        %v589 = vpop.permute.xlu0 %588
        %590 = vrot.lane.b32.xlu0 %v454, 20
        %v591 = vpop.permute.xlu0 %590
        %592 = vrot.lane.b32.xlu0 %v571, 20
        %v593 = vpop.permute.xlu0 %592
        %594 = vrot.lane.b32.xlu0 %v570, 20
        %v595 = vpop.permute.xlu0 %594
        %610 = vrot.lane.b32.xlu0 %v358, 24
        %v611 = vpop.permute.xlu0 %610
        %612 = vrot.lane.b32.xlu0 %v359, 24
        %v613 = vpop.permute.xlu0 %612
        %614 = vrot.lane.b32.xlu0 %v360, 24
        %v615 = vpop.permute.xlu0 %614
        %616 = vrot.lane.b32.xlu0 %v361, 24
        %v617 = vpop.permute.xlu0 %616
        %618 = vrot.lane.b32.xlu0 %v362, 24
        %v619 = vpop.permute.xlu0 %618
        %620 = vrot.lane.b32.xlu0 %v363, 24
        %v621 = vpop.permute.xlu0 %620
        %622 = vrot.lane.b32.xlu0 %v364, 24
        %v623 = vpop.permute.xlu0 %622
        %624 = vrot.lane.b32.xlu0 %v365, 24
        %v625 = vpop.permute.xlu0 %624
        %626 = vrot.lane.b32.xlu0 %v366, 24
        %v627 = vpop.permute.xlu0 %626
        %628 = vrot.lane.b32.xlu0 %v367, 24
        %v629 = vpop.permute.xlu0 %628
        %630 = vrot.lane.b32.xlu0 %v368, 24
        %v631 = vpop.permute.xlu0 %630
        %632 = vrot.lane.b32.xlu0 %v369, 24
        %v633 = vpop.permute.xlu0 %632
        %v646 = vrot.slane %v368, 1
        %v647 = vrot.slane %v369, 1
        %v648 = vsel %vm382, %v646, %v647
        %649 = vrot.lane.b32.xlu0 %v391, 28
        %v650 = vpop.permute.xlu0 %649
        %651 = vrot.lane.b32.xlu0 %v390, 28
        %v652 = vpop.permute.xlu0 %651
        %653 = vrot.lane.b32.xlu0 %v394, 28
        %v654 = vpop.permute.xlu0 %653
        %655 = vrot.lane.b32.xlu0 %v393, 28
        %v656 = vpop.permute.xlu0 %655
        %657 = vrot.lane.b32.xlu0 %v397, 28
        %v658 = vpop.permute.xlu0 %657
        %659 = vrot.lane.b32.xlu0 %v396, 28
        %v660 = vpop.permute.xlu0 %659
        %661 = vrot.lane.b32.xlu0 %v400, 28
        %v662 = vpop.permute.xlu0 %661
        %663 = vrot.lane.b32.xlu0 %v399, 28
        %v664 = vpop.permute.xlu0 %663
        %665 = vrot.lane.b32.xlu0 %v532, 28
        %v666 = vpop.permute.xlu0 %665
        %667 = vrot.lane.b32.xlu0 %v531, 28
        %v668 = vpop.permute.xlu0 %667
        %669 = vrot.lane.b32.xlu0 %v648, 28
        %v670 = vpop.permute.xlu0 %669
        %671 = vrot.lane.b32.xlu0 %v647, 28
        %v672 = vpop.permute.xlu0 %671
        %v685 = vrot.slane %v368, 2
        %v686 = vrot.slane %v369, 2
        %v687 = vsel %vm437, %v685, %v686
        %688 = vrot.lane.b32.xlu0 %v446, 32
        %v689 = vpop.permute.xlu0 %688
        %690 = vrot.lane.b32.xlu0 %v445, 32
        %v691 = vpop.permute.xlu0 %690
        %692 = vrot.lane.b32.xlu0 %v449, 32
        %v693 = vpop.permute.xlu0 %692
        %694 = vrot.lane.b32.xlu0 %v448, 32
        %v695 = vpop.permute.xlu0 %694
        %696 = vrot.lane.b32.xlu0 %v452, 32
        %v697 = vpop.permute.xlu0 %696
        %698 = vrot.lane.b32.xlu0 %v451, 32
        %v699 = vpop.permute.xlu0 %698
        %700 = vrot.lane.b32.xlu0 %v455, 32
        %v701 = vpop.permute.xlu0 %700
        %702 = vrot.lane.b32.xlu0 %v454, 32
        %v703 = vpop.permute.xlu0 %702
        %704 = vrot.lane.b32.xlu0 %v571, 32
        %v705 = vpop.permute.xlu0 %704
        %706 = vrot.lane.b32.xlu0 %v570, 32
        %v707 = vpop.permute.xlu0 %706
        %708 = vrot.lane.b32.xlu0 %v687, 32
        %v709 = vpop.permute.xlu0 %708
        %710 = vrot.lane.b32.xlu0 %v686, 32
        %v711 = vpop.permute.xlu0 %710
        %vm724 = vcmask 31744
        %v725 = vsel %vm724, %v354, %v402
        %v726 = vsel %vm724, %v355, %v404
        %v727 = vsel %vm724, %v356, %v406
        %v728 = vsel %vm724, %v357, %v408
        %v729 = vsel %vm724, %v358, %v410
        %v730 = vsel %vm724, %v359, %v412
        %v731 = vsel %vm724, %v360, %v414
        %v732 = vsel %vm724, %v361, %v416
        %v733 = vsel %vm724, %v362, %v418
        %v734 = vsel %vm724, %v363, %v420
        %v735 = vsel %vm724, %v364, %v422
        %v736 = vsel %vm724, %v365, %v424
        %vm737 = vcmask 64512
        %v738 = vsel %vm737, %v725, %v457
        %v739 = vsel %vm737, %v726, %v459
        %v740 = vsel %vm737, %v727, %v461
        %v741 = vsel %vm737, %v728, %v463
        %v742 = vsel %vm737, %v729, %v465
        %v743 = vsel %vm737, %v730, %v467
        %v744 = vsel %vm737, %v731, %v469
        %v745 = vsel %vm737, %v732, %v471
        %v746 = vsel %vm737, %v733, %v473
        %v747 = vsel %vm737, %v734, %v475
        %v748 = vsel %vm737, %v735, %v477
        %v749 = vsel %vm737, %v736, %v479
        %vm750 = vcmask 97280
        %v751 = vsel %vm750, %v738, %v495
        %v752 = vsel %vm750, %v739, %v497
        %v753 = vsel %vm750, %v740, %v499
        %v754 = vsel %vm750, %v741, %v501
        %v755 = vsel %vm750, %v742, %v503
        %v756 = vsel %vm750, %v743, %v505
        %v757 = vsel %vm750, %v744, %v507
        %v758 = vsel %vm750, %v745, %v509
        %v759 = vsel %vm750, %v746, %v511
        %v760 = vsel %vm750, %v747, %v513
        %v761 = vsel %vm750, %v748, %v515
        %v762 = vsel %vm750, %v749, %v517
        %vm763 = vcmask 130048
        %v764 = vsel %vm763, %v751, %v534
        %v765 = vsel %vm763, %v752, %v536
        %v766 = vsel %vm763, %v753, %v538
        %v767 = vsel %vm763, %v754, %v540
        %v768 = vsel %vm763, %v755, %v542
        %v769 = vsel %vm763, %v756, %v544
        %v770 = vsel %vm763, %v757, %v546
        %v771 = vsel %vm763, %v758, %v548
        %v772 = vsel %vm763, %v759, %v550
        %v773 = vsel %vm763, %v760, %v552
        %v774 = vsel %vm763, %v761, %v554
        %v775 = vsel %vm763, %v762, %v556
        %vm776 = vcmask 162816
        %v777 = vsel %vm776, %v764, %v573
        %v778 = vsel %vm776, %v765, %v575
        %v779 = vsel %vm776, %v766, %v577
        %v780 = vsel %vm776, %v767, %v579
        %v781 = vsel %vm776, %v768, %v581
        %v782 = vsel %vm776, %v769, %v583
        %v783 = vsel %vm776, %v770, %v585
        %v784 = vsel %vm776, %v771, %v587
        %v785 = vsel %vm776, %v772, %v589
        %v786 = vsel %vm776, %v773, %v591
        %v787 = vsel %vm776, %v774, %v593
        %v788 = vsel %vm776, %v775, %v595
        %vm789 = vcmask 195584
        %v790 = vsel %vm789, %v777, %v611
        %v791 = vsel %vm789, %v778, %v613
        %v792 = vsel %vm789, %v779, %v615
        %v793 = vsel %vm789, %v780, %v617
        %v794 = vsel %vm789, %v781, %v619
        %v795 = vsel %vm789, %v782, %v621
        %v796 = vsel %vm789, %v783, %v623
        %v797 = vsel %vm789, %v784, %v625
        %v798 = vsel %vm789, %v785, %v627
        %v799 = vsel %vm789, %v786, %v629
        %v800 = vsel %vm789, %v787, %v631
        %v801 = vsel %vm789, %v788, %v633
        %vm802 = vcmask 228352
        %v803 = vsel %vm802, %v790, %v650
        %v804 = vsel %vm802, %v791, %v652
        %v805 = vsel %vm802, %v792, %v654
        %v806 = vsel %vm802, %v793, %v656
        %v807 = vsel %vm802, %v794, %v658
        %v808 = vsel %vm802, %v795, %v660
        %v809 = vsel %vm802, %v796, %v662
        %v810 = vsel %vm802, %v797, %v664
        %v811 = vsel %vm802, %v798, %v666
        %v812 = vsel %vm802, %v799, %v668
        %v813 = vsel %vm802, %v800, %v670
        %v814 = vsel %vm802, %v801, %v672
        %vm815 = vcmask 261120
        %v816 = vsel %vm815, %v803, %v689
        %v817 = vsel %vm815, %v804, %v691
        %v818 = vsel %vm815, %v805, %v693
        %v819 = vsel %vm815, %v806, %v695
        %v820 = vsel %vm815, %v807, %v697
        %v821 = vsel %vm815, %v808, %v699
        %v822 = vsel %vm815, %v809, %v701
        %v823 = vsel %vm815, %v810, %v703
        %v824 = vsel %vm815, %v811, %v705
        %v825 = vsel %vm815, %v812, %v707
        %v826 = vsel %vm815, %v813, %v709
        %v827 = vsel %vm815, %v814, %v711
        %v840 = vrot.slane %v816, 2
        %v841 = vrot.slane %v816, 4
        %v842 = vrot.slane %v816, 6
        %v843 = vrot.slane %v818, 2
        %v844 = vrot.slane %v818, 4
        %v845 = vrot.slane %v818, 6
        %v846 = vrot.slane %v820, 2
        %v847 = vrot.slane %v820, 4
        %v848 = vrot.slane %v820, 6
        %v849 = vrot.slane %v822, 2
        %v850 = vrot.slane %v822, 4
        %v851 = vrot.slane %v822, 6
        %v852 = vrot.slane %v824, 2
        %v853 = vrot.slane %v824, 4
        %v854 = vrot.slane %v824, 6
        %v855 = vrot.slane %v826, 2
        %v856 = vrot.slane %v826, 4
        %v857 = vrot.slane %v826, 6
        %858 = vst [vmem:[#allocation1] ss:$4 sm:$0xff] %v816
        %s859 = scalar_lea.vmem [#allocation1], 1
        %860 = vst [vmem:[%s859] ss:$4 sm:$0xff] %v840
        %s861 = scalar_lea.vmem [#allocation1], 2
        %862 = vst [vmem:[%s861] ss:$4 sm:$0xff] %v841
        %s863 = scalar_lea.vmem [#allocation1], 3
        %864 = vst [vmem:[%s863] ss:$4 sm:$0xff] %v842
        %s865 = scalar_lea.vmem [#allocation1], 32
        %866 = vst [vmem:[%s865] ss:$4 sm:$0xff] %v817
        %s867 = scalar_lea.vmem [#allocation1], 33
        %868 = vst [vmem:[%s867] ss:$4 sm:$0xff] %v818
        %s869 = scalar_lea.vmem [#allocation1], 34
        %870 = vst [vmem:[%s869] ss:$4 sm:$0xff] %v843
        %s871 = scalar_lea.vmem [#allocation1], 35
        %872 = vst [vmem:[%s871] ss:$4 sm:$0xff] %v844
        %v873 = vld.sshfl [vmem:[#allocation1] sm:$0xff pattern:$0x73625140]
        %v874 = vld.sshfl [vmem:[#allocation1 + $0x20] sm:$0xff pattern:$0x73625140]
        %875 = vst [vmem:[#allocation1] ss:$4 sm:$0xff] %v845
        %876 = vst [vmem:[%s859] ss:$4 sm:$0xff] %v819
        %877 = vst [vmem:[%s861] ss:$4 sm:$0xff] %v820
        %878 = vst [vmem:[%s863] ss:$4 sm:$0xff] %v846
        %879 = vst [vmem:[%s865] ss:$4 sm:$0xff] %v847
        %880 = vst [vmem:[%s867] ss:$4 sm:$0xff] %v848
        %881 = vst [vmem:[%s869] ss:$4 sm:$0xff] %v821
        %882 = vst [vmem:[%s871] ss:$4 sm:$0xff] %v822
        %v883 = vld.sshfl [vmem:[#allocation1] sm:$0xff pattern:$0x73625140]
        %v884 = vld.sshfl [vmem:[#allocation1 + $0x20] sm:$0xff pattern:$0x73625140]
        %885 = vst [vmem:[#allocation1] ss:$4 sm:$0xff] %v849
        %886 = vst [vmem:[%s859] ss:$4 sm:$0xff] %v850
        %887 = vst [vmem:[%s861] ss:$4 sm:$0xff] %v851
        %888 = vst [vmem:[%s863] ss:$4 sm:$0xff] %v823
        %889 = vst [vmem:[%s865] ss:$4 sm:$0xff] %v824
        %890 = vst [vmem:[%s867] ss:$4 sm:$0xff] %v852
        %891 = vst [vmem:[%s869] ss:$4 sm:$0xff] %v853
        %892 = vst [vmem:[%s871] ss:$4 sm:$0xff] %v854
        %v893 = vld.sshfl [vmem:[#allocation1] sm:$0xff pattern:$0x73625140]
        %v894 = vld.sshfl [vmem:[#allocation1 + $0x20] sm:$0xff pattern:$0x73625140]
        %895 = vst [vmem:[#allocation1] ss:$4 sm:$0xff] %v825
        %896 = vst [vmem:[%s859] ss:$4 sm:$0xff] %v826
        %897 = vst [vmem:[%s861] ss:$4 sm:$0xff] %v855
        %898 = vst [vmem:[%s863] ss:$4 sm:$0xff] %v856
        %899 = vst [vmem:[%s865] ss:$4 sm:$0xff] %v857
        %900 = vst [vmem:[%s867] ss:$4 sm:$0xff] %v827
        %v901 = vld.sshfl [vmem:[#allocation1] sm:$0xff pattern:$0x73625140]
        %v902 = vld.sshfl [vmem:[#allocation1 + $0x20] sm:$0xff pattern:$0x73625140]
        %v911 = vpack.c.bf16 %v874, %v873
        %v912 = vpack.c.bf16 %v884, %v883
        %v913 = vpack.c.bf16 %v894, %v893
        %v914 = vpack.c.bf16 %v902, %v901
        %v915 = vld [vmem:[%s1] sm:$0xf]
        %v916 = vld [vmem:[%s1 + $0x4] sm:$0xf]
        %v917 = vld [vmem:[%s1 + $0x8] sm:$0xf]
        %v918 = vld [vmem:[%s1 + $0xc] sm:$0xf]
        %v919 = vld [vmem:[%s1 + $0x10] sm:$0x3]
        %v920 = vld [vmem:[%s2] sm:$0x1]
        %v922 = vperm.slane %v920, 0
        %v929 = vunpack.c.l.b16 %v915
        %v930 = vunpack.c.l.b16 %v916
        %v931 = vunpack.c.l.b16 %v917
        %v932 = vunpack.c.l.b16 %v918
        %v933 = vunpack.c.l.b16 %v919
        %v934 = vpack.c.b16 %v930, %v929
        %v935 = vpack.c.b16 %v932, %v931
        %v936 = vpack.c.b16 %v933, %v933
        %vm939 = vcmask 293888
        %v941 = vsel %vm939, %v911, 0
        %v944 = vsel %vm939, %v912, 0
        %v947 = vsel %vm939, %v913, 0
        %v950 = vsel %vm939, %v914, 0
        %vm952 = vcmask 1041408
        %v954 = vsel %vm952, %v936, 0
        %956 = vmatpush.bf16.msra.mxu0 0
        %957 = vmatpush.bf16.msra.mxu0 0
        %958 = vmatpush.bf16.msra.mxu0 0
        %959 = vmatpush.bf16.msra.mxu0 0
        %960 = vmatpush.bf16.msra.mxu0 0
        %961 = vmatpush.bf16.msra.mxu0 %v954
        %962 = vmatpush.bf16.msra.mxu0 %v935
        %963 = vmatpush.bf16.msra.mxu0 %v934
        %964 = vmatmul.bf16.gmra.mxu0 %v941
        %v965 = vpop.f32.mrf.mxu0
        %v966 = vadd.f32 %v922, %v965
        %v967 = vpop.f32.mrf.mxu0
        %v968 = vadd.f32 %v922, %v967
        %969 = vmatmul.bf16.gmra.mxu0 %v944
        %v970 = vpop.f32.mrf.mxu0
        %v971 = vadd.f32 %v922, %v970
        %v972 = vpop.f32.mrf.mxu0
        %v973 = vadd.f32 %v922, %v972
        %974 = vmatmul.bf16.gmra.mxu0 %v947
        %v975 = vpop.f32.mrf.mxu0
        %v976 = vadd.f32 %v922, %v975
        %v977 = vpop.f32.mrf.mxu0
        %v978 = vadd.f32 %v922, %v977
        %979 = vmatmul.bf16.gmra.mxu0 %v950
        %v980 = vpop.f32.mrf.mxu0
        %v981 = vadd.f32 %v922, %v980
        %v982 = vpop.f32.mrf.mxu0
        %v983 = vadd.f32 %v922, %v982
        %984 = vdwg.mxu0
        %v985 = vmax.f32 %v966, 0.0
        %v986 = vmax.f32 %v968, 0.0
        %v987 = vmax.f32 %v971, 0.0
        %v988 = vmax.f32 %v973, 0.0
        %v989 = vmax.f32 %v976, 0.0
        %v990 = vmax.f32 %v978, 0.0
        %v991 = vmax.f32 %v981, 0.0
        %v992 = vmax.f32 %v983, 0.0
        %v1001 = vrot.slane %v985, 2
        %v1002 = vrot.slane %v985, 4
        %v1003 = vrot.slane %v985, 6
        %v1004 = vrot.slane %v986, 2
        %v1005 = vrot.slane %v986, 4
        %v1006 = vrot.slane %v986, 6
        %v1007 = vrot.slane %v987, 2
        %v1008 = vrot.slane %v987, 4
        %v1009 = vrot.slane %v987, 6
        %v1010 = vrot.slane %v988, 2
        %v1011 = vrot.slane %v988, 4
        %v1012 = vrot.slane %v988, 6
        %v1013 = vrot.slane %v989, 2
        %v1014 = vrot.slane %v989, 4
        %v1015 = vrot.slane %v989, 6
        %v1016 = vrot.slane %v990, 2
        %v1017 = vrot.slane %v990, 4
        %v1018 = vrot.slane %v990, 6
        %v1019 = vrot.slane %v991, 2
        %v1020 = vrot.slane %v991, 4
        %v1021 = vrot.slane %v991, 6
        %v1022 = vrot.slane %v992, 2
        %v1023 = vlaneseq
        %v1024 = vshrl.u32 %v1023, 7
        %v1025 = vadd.s32 %v1024, 8
        %s1026 = ssub.s32 %s239, 1
        %v1027 = vstv %s1026
        %v1028 = vadd.s32 %v1027, 1
        %v1029 = vadd.s32 %v1027, 2
        %v1030 = vadd.s32 %v1027, 3
        %v1031 = vadd.s32 %v1027, 4
        %v1032 = vadd.s32 %v1027, 5
        %vm1033 = vcmp.ge.s32.totalorder %v1027, 0
        %vm1034 = vcmp.ge.s32.totalorder %v1028, 0
        %vm1035 = vcmp.ge.s32.totalorder %v1029, 0
        %vm1036 = vcmp.ge.s32.totalorder %v1030, 0
        %vm1037 = vcmp.ge.s32.totalorder %v1031, 0
        %vm1038 = vcmp.ge.s32.totalorder %v1032, 0
        %vm1039 = vcmp.lt.s32.totalorder %v1027, 8
        %vm1040 = vcmp.lt.s32.totalorder %v1028, 8
        %vm1041 = vcmp.lt.s32.totalorder %v1029, 8
        %vm1042 = vcmp.lt.s32.totalorder %v1030, 8
        %vm1043 = vcmp.lt.s32.totalorder %v1031, 8
        %vm1044 = vcmp.lt.s32.totalorder %v1032, 8
        %vm1045 = vmand %vm1033, %vm1039
        %vm1046 = vmand %vm1034, %vm1040
        %vm1047 = vmand %vm1035, %vm1041
        %vm1048 = vmand %vm1036, %vm1042
        %vm1049 = vmand %vm1037, %vm1043
        %vm1050 = vmand %vm1038, %vm1044
        %vm1051 = vcmp.ge.s32.totalorder %v1024, 1
        %vm1052 = vcmp.ge.s32.totalorder %v1025, 1
        %v1053 = vsel %vm1045, 1, 0
        %v1054 = vsel %vm1046, 1, 0
        %v1055 = vsel %vm1047, 1, 0
        %v1056 = vsel %vm1048, 1, 0
        %v1057 = vsel %vm1049, 1, 0
        %v1058 = vsel %vm1050, 1, 0
        %vm1059 = vcmp.eq.s32.totalorder %v1053, 1
        %vm1060 = vcmp.eq.s32.totalorder %v1054, 1
        %vm1061 = vcmp.eq.s32.totalorder %v1055, 1
        %vm1062 = vcmp.eq.s32.totalorder %v1056, 1
        %vm1063 = vcmp.eq.s32.totalorder %v1057, 1
        %vm1064 = vcmp.eq.s32.totalorder %v1058, 1
        %v1065 = vsel %vm1051, 1, 0
        %v1066 = vsel %vm1052, 1, 0
        %vm1067 = vcmp.eq.s32.totalorder %v1065, 1
        %vm1068 = vcmp.eq.s32.totalorder %v1066, 1
        %vm1069 = vmand %vm1059, %vm1067
        %vm1070 = vmand %vm1059, %vm1068
        %vm1071 = vmand %vm1060, %vm1067
        %vm1072 = vmand %vm1060, %vm1068
        %vm1073 = vmand %vm1061, %vm1067
        %vm1074 = vmand %vm1061, %vm1068
        %vm1075 = vmand %vm1062, %vm1067
        %vm1076 = vmand %vm1062, %vm1068
        %vm1077 = vmand %vm1063, %vm1067
        %vm1078 = vmand %vm1063, %vm1068
        %vm1079 = vmand %vm1064, %vm1067
        %vm1080 = vmand %vm1064, %vm1068
        %vm1081 = vcmp.le.s32.totalorder %v1024, 8
        %vm1082 = vcmp.le.s32.totalorder %v1025, 8
        %v1083 = vsel %vm1081, 1, 0
        %v1084 = vsel %vm1082, 1, 0
        %vm1085 = vcmp.eq.s32.totalorder %v1083, 1
        %vm1086 = vcmp.eq.s32.totalorder %v1084, 1
        %vm1087 = vmand %vm1069, %vm1085
        %vm1088 = vmand %vm1070, %vm1086
        %vm1089 = vmand %vm1071, %vm1085
        %vm1090 = vmand %vm1072, %vm1086
        %vm1091 = vmand %vm1073, %vm1085
        %vm1092 = vmand %vm1074, %vm1086
        %vm1093 = vmand %vm1075, %vm1085
        %vm1094 = vmand %vm1076, %vm1086
        %vm1095 = vmand %vm1077, %vm1085
        %vm1096 = vmand %vm1078, %vm1086
        %vm1097 = vmand %vm1079, %vm1085
        %vm1098 = vmand %vm1080, %vm1086
        %v1099 = vsel %vm1087, 1, 0
        %v1100 = vsel %vm1088, 1, 0
        %v1101 = vsel %vm1089, 1, 0
        %v1102 = vsel %vm1090, 1, 0
        %v1103 = vsel %vm1091, 1, 0
        %v1104 = vsel %vm1092, 1, 0
        %v1105 = vsel %vm1093, 1, 0
        %v1106 = vsel %vm1094, 1, 0
        %v1107 = vsel %vm1095, 1, 0
        %v1108 = vsel %vm1096, 1, 0
        %v1109 = vsel %vm1097, 1, 0
        %v1110 = vsel %vm1098, 1, 0
        %vm1111 = vcmp.eq.s32.totalorder %v1099, 1
        %vm1112 = vcmp.eq.s32.totalorder %v1100, 1
        %vm1113 = vcmp.eq.s32.totalorder %v1101, 1
        %vm1114 = vcmp.eq.s32.totalorder %v1102, 1
        %vm1115 = vcmp.eq.s32.totalorder %v1103, 1
        %vm1116 = vcmp.eq.s32.totalorder %v1104, 1
        %vm1117 = vcmp.eq.s32.totalorder %v1105, 1
        %vm1118 = vcmp.eq.s32.totalorder %v1106, 1
        %vm1119 = vcmp.eq.s32.totalorder %v1107, 1
        %vm1120 = vcmp.eq.s32.totalorder %v1108, 1
        %vm1121 = vcmp.eq.s32.totalorder %v1109, 1
        %vm1122 = vcmp.eq.s32.totalorder %v1110, 1
        %1123 = vst [vmem:[#allocation1] ss:$4 sm:$0xff] %v985
        %s1124 = scalar_lea.vmem [#allocation1], 1
        %1125 = vst [vmem:[%s1124] ss:$4 sm:$0xff] %v1001
        %s1126 = scalar_lea.vmem [#allocation1], 2
        %1127 = vst [vmem:[%s1126] ss:$4 sm:$0xff] %v1002
        %s1128 = scalar_lea.vmem [#allocation1], 3
        %1129 = vst [vmem:[%s1128] ss:$4 sm:$0xff] %v1003
        %s1130 = scalar_lea.vmem [#allocation1], 32
        %1131 = vst [vmem:[%s1130] ss:$4 sm:$0xff] %v986
        %v1132 = vld.sshfl [vmem:[#allocation1] sm:$0xff pattern:$0x73625140]
        %v1133 = vld.sshfl [vmem:[#allocation1 + $0x20] sm:$0xff pattern:$0x73625140]
        %1134 = vst [vmem:[#allocation1] ss:$4 sm:$0xff] %v1004
        %1135 = vst [vmem:[%s1124] ss:$4 sm:$0xff] %v1005
        %1136 = vst [vmem:[%s1126] ss:$4 sm:$0xff] %v1006
        %1137 = vst [vmem:[%s1128] ss:$4 sm:$0xff] %v987
        %1138 = vst [vmem:[%s1130] ss:$4 sm:$0xff] %v1007
        %v1139 = vld.sshfl [vmem:[#allocation1] sm:$0xff pattern:$0x73625140]
        %v1140 = vld.sshfl [vmem:[#allocation1 + $0x20] sm:$0xff pattern:$0x73625140]
        %1141 = vst [vmem:[#allocation1] ss:$4 sm:$0xff] %v1008
        %1142 = vst [vmem:[%s1124] ss:$4 sm:$0xff] %v1009
        %1143 = vst [vmem:[%s1126] ss:$4 sm:$0xff] %v988
        %1144 = vst [vmem:[%s1128] ss:$4 sm:$0xff] %v1010
        %1145 = vst [vmem:[%s1130] ss:$4 sm:$0xff] %v1011
        %v1146 = vld.sshfl [vmem:[#allocation1] sm:$0xff pattern:$0x73625140]
        %v1147 = vld.sshfl [vmem:[#allocation1 + $0x20] sm:$0xff pattern:$0x73625140]
        %1148 = vst [vmem:[#allocation1] ss:$4 sm:$0xff] %v1012
        %1149 = vst [vmem:[%s1124] ss:$4 sm:$0xff] %v989
        %1150 = vst [vmem:[%s1126] ss:$4 sm:$0xff] %v1013
        %1151 = vst [vmem:[%s1128] ss:$4 sm:$0xff] %v1014
        %1152 = vst [vmem:[%s1130] ss:$4 sm:$0xff] %v1015
        %v1153 = vld.sshfl [vmem:[#allocation1] sm:$0xff pattern:$0x73625140]
        %v1154 = vld.sshfl [vmem:[#allocation1 + $0x20] sm:$0xff pattern:$0x73625140]
        %1155 = vst [vmem:[#allocation1] ss:$4 sm:$0xff] %v990
        %1156 = vst [vmem:[%s1124] ss:$4 sm:$0xff] %v1016
        %1157 = vst [vmem:[%s1126] ss:$4 sm:$0xff] %v1017
        %1158 = vst [vmem:[%s1128] ss:$4 sm:$0xff] %v1018
        %1159 = vst [vmem:[%s1130] ss:$4 sm:$0xff] %v991
        %v1160 = vld.sshfl [vmem:[#allocation1] sm:$0xff pattern:$0x73625140]
        %v1161 = vld.sshfl [vmem:[#allocation1 + $0x20] sm:$0xff pattern:$0x73625140]
        %1162 = vst [vmem:[#allocation1] ss:$4 sm:$0xff] %v1019
        %1163 = vst [vmem:[%s1124] ss:$4 sm:$0xff] %v1020
        %1164 = vst [vmem:[%s1126] ss:$4 sm:$0xff] %v1021
        %1165 = vst [vmem:[%s1128] ss:$4 sm:$0xff] %v992
        %1166 = vst [vmem:[%s1130] ss:$4 sm:$0xff] %v1022
        %v1167 = vld.sshfl [vmem:[#allocation1] sm:$0xff pattern:$0x73625140]
        %v1168 = vld.sshfl [vmem:[#allocation1 + $0x20] sm:$0xff pattern:$0x73625140]
        %v1181 = vsel %vm1111, %v1132, 0.0
        %v1182 = vsel %vm1112, %v1133, 0.0
        %v1183 = vsel %vm1113, %v1139, 0.0
        %v1184 = vsel %vm1114, %v1140, 0.0
        %v1185 = vsel %vm1115, %v1146, 0.0
        %v1186 = vsel %vm1116, %v1147, 0.0
        %v1187 = vsel %vm1117, %v1153, 0.0
        %v1188 = vsel %vm1118, %v1154, 0.0
        %v1189 = vsel %vm1119, %v1160, 0.0
        %v1190 = vsel %vm1120, %v1161, 0.0
        %v1191 = vsel %vm1121, %v1167, 0.0
        %v1192 = vsel %vm1122, %v1168, 0.0
        %v1201 = vrot.slane %v1181, 1
        %v1202 = vrot.slane %v1182, 1
        %v1203 = vsel %vm382, %v1201, %v1202
        %v1204 = vrot.slane %v1183, 1
        %v1205 = vrot.slane %v1184, 1
        %v1206 = vsel %vm382, %v1204, %v1205
        %v1207 = vrot.slane %v1185, 1
        %v1208 = vrot.slane %v1186, 1
        %v1209 = vsel %vm382, %v1207, %v1208
        %v1210 = vrot.slane %v1187, 1
        %v1211 = vrot.slane %v1188, 1
        %v1212 = vsel %vm382, %v1210, %v1211
        %1213 = vrot.lane.b32.xlu0 %v1203, 8
        %v1214 = vpop.permute.xlu0 %1213
        %1215 = vrot.lane.b32.xlu0 %v1206, 8
        %v1216 = vpop.permute.xlu0 %1215
        %1217 = vrot.lane.b32.xlu0 %v1209, 8
        %v1218 = vpop.permute.xlu0 %1217
        %1219 = vrot.lane.b32.xlu0 %v1212, 8
        %v1220 = vpop.permute.xlu0 %1219
        %v1225 = vrot.slane %v1181, 2
        %v1226 = vrot.slane %v1182, 2
        %v1227 = vsel %vm437, %v1225, %v1226
        %v1228 = vrot.slane %v1183, 2
        %v1229 = vrot.slane %v1184, 2
        %v1230 = vsel %vm437, %v1228, %v1229
        %v1231 = vrot.slane %v1185, 2
        %v1232 = vrot.slane %v1186, 2
        %v1233 = vsel %vm437, %v1231, %v1232
        %v1234 = vrot.slane %v1187, 2
        %v1235 = vrot.slane %v1188, 2
        %v1236 = vsel %vm437, %v1234, %v1235
        %1237 = vrot.lane.b32.xlu0 %v1227, 16
        %v1238 = vpop.permute.xlu0 %1237
        %1239 = vrot.lane.b32.xlu0 %v1230, 16
        %v1240 = vpop.permute.xlu0 %1239
        %1241 = vrot.lane.b32.xlu0 %v1233, 16
        %v1242 = vpop.permute.xlu0 %1241
        %1243 = vrot.lane.b32.xlu0 %v1236, 16
        %v1244 = vpop.permute.xlu0 %1243
        %1250 = vrot.lane.b32.xlu0 %v1183, 24
        %v1251 = vpop.permute.xlu0 %1250
        %1252 = vrot.lane.b32.xlu0 %v1185, 24
        %v1253 = vpop.permute.xlu0 %1252
        %1254 = vrot.lane.b32.xlu0 %v1187, 24
        %v1255 = vpop.permute.xlu0 %1254
        %1256 = vrot.lane.b32.xlu0 %v1189, 24
        %v1257 = vpop.permute.xlu0 %1256
        %v1263 = vrot.slane %v1189, 1
        %v1264 = vrot.slane %v1190, 1
        %v1265 = vsel %vm382, %v1263, %v1264
        %1266 = vrot.lane.b32.xlu0 %v1206, 32
        %v1267 = vpop.permute.xlu0 %1266
        %1268 = vrot.lane.b32.xlu0 %v1209, 32
        %v1269 = vpop.permute.xlu0 %1268
        %1270 = vrot.lane.b32.xlu0 %v1212, 32
        %v1271 = vpop.permute.xlu0 %1270
        %1272 = vrot.lane.b32.xlu0 %v1265, 32
        %v1273 = vpop.permute.xlu0 %1272
        %v1278 = vrot.slane %v1189, 2
        %v1279 = vrot.slane %v1190, 2
        %v1280 = vsel %vm437, %v1278, %v1279
        %1281 = vrot.lane.b32.xlu0 %v1230, 40
        %v1282 = vpop.permute.xlu0 %1281
        %1283 = vrot.lane.b32.xlu0 %v1233, 40
        %v1284 = vpop.permute.xlu0 %1283
        %1285 = vrot.lane.b32.xlu0 %v1236, 40
        %v1286 = vpop.permute.xlu0 %1285
        %1287 = vrot.lane.b32.xlu0 %v1280, 40
        %v1288 = vpop.permute.xlu0 %1287
        %1294 = vrot.lane.b32.xlu0 %v1185, 48
        %v1295 = vpop.permute.xlu0 %1294
        %1296 = vrot.lane.b32.xlu0 %v1187, 48
        %v1297 = vpop.permute.xlu0 %1296
        %1298 = vrot.lane.b32.xlu0 %v1189, 48
        %v1299 = vpop.permute.xlu0 %1298
        %1300 = vrot.lane.b32.xlu0 %v1191, 48
        %v1301 = vpop.permute.xlu0 %1300
        %v1307 = vrot.slane %v1191, 1
        %v1308 = vrot.slane %v1192, 1
        %v1309 = vsel %vm382, %v1307, %v1308
        %1310 = vrot.lane.b32.xlu0 %v1209, 56
        %v1311 = vpop.permute.xlu0 %1310
        %1312 = vrot.lane.b32.xlu0 %v1212, 56
        %v1313 = vpop.permute.xlu0 %1312
        %1314 = vrot.lane.b32.xlu0 %v1265, 56
        %v1315 = vpop.permute.xlu0 %1314
        %1316 = vrot.lane.b32.xlu0 %v1309, 56
        %v1317 = vpop.permute.xlu0 %1316
        %v1322 = vrot.slane %v1191, 2
        %v1323 = vrot.slane %v1192, 2
        %v1324 = vsel %vm437, %v1322, %v1323
        %1325 = vrot.lane.b32.xlu0 %v1233, 64
        %v1326 = vpop.permute.xlu0 %1325
        %1327 = vrot.lane.b32.xlu0 %v1236, 64
        %v1328 = vpop.permute.xlu0 %1327
        %1329 = vrot.lane.b32.xlu0 %v1280, 64
        %v1330 = vpop.permute.xlu0 %1329
        %1331 = vrot.lane.b32.xlu0 %v1324, 64
        %v1332 = vpop.permute.xlu0 %1331
        %v1337 = vsel %vm737, %v1181, %v1214
        %v1338 = vsel %vm737, %v1183, %v1216
        %v1339 = vsel %vm737, %v1185, %v1218
        %v1340 = vsel %vm737, %v1187, %v1220
        %v1341 = vsel %vm763, %v1337, %v1238
        %v1342 = vsel %vm763, %v1338, %v1240
        %v1343 = vsel %vm763, %v1339, %v1242
        %v1344 = vsel %vm763, %v1340, %v1244
        %v1345 = vsel %vm789, %v1341, %v1251
        %v1346 = vsel %vm789, %v1342, %v1253
        %v1347 = vsel %vm789, %v1343, %v1255
        %v1348 = vsel %vm789, %v1344, %v1257
        %v1349 = vsel %vm815, %v1345, %v1267
        %v1350 = vsel %vm815, %v1346, %v1269
        %v1351 = vsel %vm815, %v1347, %v1271
        %v1352 = vsel %vm815, %v1348, %v1273
        %vm1353 = vcmask 326656
        %v1354 = vsel %vm1353, %v1349, %v1282
        %v1355 = vsel %vm1353, %v1350, %v1284
        %v1356 = vsel %vm1353, %v1351, %v1286
        %v1357 = vsel %vm1353, %v1352, %v1288
        %vm1358 = vcmask 392192
        %v1359 = vsel %vm1358, %v1354, %v1295
        %v1360 = vsel %vm1358, %v1355, %v1297
        %v1361 = vsel %vm1358, %v1356, %v1299
        %v1362 = vsel %vm1358, %v1357, %v1301
        %vm1363 = vcmask 457728
        %v1364 = vsel %vm1363, %v1359, %v1311
        %v1365 = vsel %vm1363, %v1360, %v1313
        %v1366 = vsel %vm1363, %v1361, %v1315
        %v1367 = vsel %vm1363, %v1362, %v1317
        %vm1368 = vcmask 523264
        %v1369 = vsel %vm1368, %v1364, %v1326
        %v1370 = vsel %vm1368, %v1365, %v1328
        %v1371 = vsel %vm1368, %v1366, %v1330
        %v1372 = vsel %vm1368, %v1367, %v1332
        %v1373 = vpack.c.bf16 %v1370, %v1369
        %v1374 = vpack.c.bf16 %v1372, %v1371
        %v1375 = vld [vmem:[%s3] sm:$0xf]
        %v1376 = vld [vmem:[%s3 + $0x4] sm:$0xf]
        %v1377 = vld [vmem:[%s3 + $0x8] sm:$0xf]
        %v1378 = vld [vmem:[%s3 + $0xc] sm:$0xf]
        %v1379 = vld [vmem:[%s3 + $0x10] sm:$0xf]
        %v1380 = vld [vmem:[%s3 + $0x14] sm:$0xf]
        %v1381 = vld [vmem:[%s3 + $0x18] sm:$0xf]
        %v1382 = vld [vmem:[%s3 + $0x1c] sm:$0xf]
        %v1383 = vld [vmem:[%s3 + $0x20] sm:$0xf]
        %v1384 = vld [vmem:[%s4] sm:$0x1]
        %v1386 = vperm.slane %v1384, 0
        %v1397 = vunpack.c.l.b16 %v1375
        %v1398 = vunpack.c.l.b16 %v1376
        %v1399 = vunpack.c.l.b16 %v1377
        %v1400 = vunpack.c.l.b16 %v1378
        %v1401 = vunpack.c.l.b16 %v1379
        %v1402 = vunpack.c.l.b16 %v1380
        %v1403 = vunpack.c.l.b16 %v1381
        %v1404 = vunpack.c.l.b16 %v1382
        %v1405 = vunpack.c.l.b16 %v1383
        %v1406 = vpack.c.b16 %v1398, %v1397
        %v1407 = vpack.c.b16 %v1400, %v1399
        %v1408 = vpack.c.b16 %v1402, %v1401
        %v1409 = vpack.c.b16 %v1404, %v1403
        %v1410 = vpack.c.b16 %v1405, %v1405
        %vm1415 = vcmask 588800
        %v1417 = vsel %vm1415, %v1373, 0
        %v1420 = vsel %vm1415, %v1374, 0
        %vm1422 = vcmask 1043456
        %v1424 = vsel %vm1422, %v1410, 0
        %1426 = vmatpush.bf16.msra.mxu0 0
        %1427 = vmatpush.bf16.msra.mxu0 0
        %1428 = vmatpush.bf16.msra.mxu0 0
        %1429 = vmatpush.bf16.msra.mxu0 %v1424
        %1430 = vmatpush.bf16.msra.mxu0 %v1409
        %1431 = vmatpush.bf16.msra.mxu0 %v1408
        %1432 = vmatpush.bf16.msra.mxu0 %v1407
        %1433 = vmatpush.bf16.msra.mxu0 %v1406
        %1434 = vmatmul.bf16.gmra.mxu0 %v1417
        %v1435 = vpop.f32.mrf.mxu0
        %v1436 = vadd.f32 %v1386, %v1435
        %v1437 = vpop.f32.mrf.mxu0
        %v1438 = vadd.f32 %v1386, %v1437
        %1439 = vmatmul.bf16.gmra.mxu0 %v1420
        %v1440 = vpop.f32.mrf.mxu0
        %v1441 = vadd.f32 %v1386, %v1440
        %v1442 = vpop.f32.mrf.mxu0
        %v1443 = vadd.f32 %v1386, %v1442
        %1444 = vdwg.mxu0
        %v1445 = vmax.f32 %v1436, 0.0
        %v1446 = vmax.f32 %v1438, 0.0
        %v1447 = vmax.f32 %v1441, 0.0
        %v1448 = vmax.f32 %v1443, 0.0
        %1449 = vst [vmem:[%s231] sm:$0xff] %v1445
        %1450 = vst [vmem:[%s231 + $0x8] sm:$0xff] %v1446
        %1451 = vst [vmem:[%s231 + $0x10] sm:$0xff] %v1447
        %1452 = vst [vmem:[%s231 + $0x18] sm:$0xff] %v1448
        %s1453 = sand.u32 %s151, 1
        %s1454 = scalar_lea.sflag [#allocation3], %s1453
        %s1455 = sand.u32 %s151, 1
        %s1456 = smul.addr %s1455, 32
        %s1457 = scalar_lea.vmem [#allocation2], %s1456
        // Predicated region
        $region41: #{tpu_custom_call.1} parent=39 // pred_check
          %p1458 = pneg %p161
        $region42: #{tpu_custom_call.1} parent=39 // pred_check_branch
          %1460 = sbr.rel (%p1458) target = $region44
        $region43: #{tpu_custom_call.1} parent=39 // pred_region
          %s1461 = smul.u32 4, %s24
          %1463 = vsyncadd %s1454, 0
          %s1464 = smul.addr %s23, 8
          %s1465 = sadd.s32 %s1461, %s1464
          %s1466 = smul.addr %s1465, 8
          %s1467 = scalar_lea.hbm %s5, %s1466
          %s1468 = sshll.u32 %s1457, 4
          %s1469 = int_to_ptr.vmem [resolvable:$true] %s1468
          %s1470 = sshll.u32 %s1467, 4
          %s1471 = int_to_ptr.hbm [resolvable:$true] %s1470
          %1476 = dma.vmem_to_hbm [thread:$0]  %s1469, 512, %s1471, %s1454, 128, 128, 8
        $region44: #{tpu_custom_call.1} parent=39 // pred_fallthru
          _
      $region40: #{tpu_custom_call.1} parent=5 // pred_fallthru
        _
      %p1477 = scmp.le.s32.totalorder 2, %s14
      // Predicated region
      $region45: #{tpu_custom_call.1} parent=5 // pred_check
        %p1478 = pneg %p1477
      $region46: #{tpu_custom_call.1} parent=5 // pred_check_branch
        %1480 = sbr.rel (%p1478) target = $region48
      $region47: #{tpu_custom_call.1} parent=5 // pred_region
        %s1481 = ssub.s32 %s14, 2
        // Predicated region
        $region49: #{tpu_custom_call.1} parent=47 // pred_check
          %p1482 = pneg %p167
        $region50: #{tpu_custom_call.1} parent=47 // pred_check_branch
          %1484 = sbr.rel (%p1482) target = $region52
        $region51: #{tpu_custom_call.1} parent=47 // pred_region
          %s1485 = sand.u32 %s152, 1
          %s1486 = scalar_lea.sflag [#allocation3], %s1485
          %s1487 = sand.u32 %s152, 1
          %s1488 = smul.addr %s1487, 32
          %s1489 = scalar_lea.vmem [#allocation2], %s1488
          %1491 = dma.done %s1486, 512
        $region52: #{tpu_custom_call.1} parent=47 // pred_fallthru
          _
      $region48: #{tpu_custom_call.1} parent=5 // pred_fallthru
        _
    $region6: #{tpu_custom_call.1} parent=1 // loop_footer
      %s18 = sadd.s32 1, %s14
    $region7: #{tpu_custom_call.1} parent=1 // loop_footer_branch
      %13 = sbr.rel target = $region3
    $region8: #{tpu_custom_call.1} parent=1 // loop_exit
      _
    %1492 = vsyncpa [#allocation3], 1
    %s1493 = scalar_lea.sflag [#allocation3], 1
    %1494 = vsyncpa %s1493, 1

</llo_original>
